<compile_context>
chip_gen: v7x
topology: tpu7x:2x2x1
jax: 0.10.0
libtpu: 0.0.40
codegen_flags: <defaults>
</compile_context>

<pallas_src>
import functools

import jax
import jax.numpy as jnp
import numpy as np
from jax.experimental import pallas as pl
from jax.experimental.pallas import tpu as pltpu


def _choose_tile(n, target):
    """Largest row tile that divides n, is a multiple of 8 and is <= target."""
    if n <= target:
        return n
    tn = (min(n, target) // 8) * 8
    while tn >= 8:
        if n % tn == 0:
            return tn
        tn -= 8
    return n  # fall back to a single block


def _make_scores_kernel(n_total, m, d, h):
    inv_n = 1.0 / float(n_total)

    def kernel(z_ref, w1_ref, b1_ref, w2_ref, beta_ref, acc_ref):
        step = pl.program_id(0)

        @pl.when(step == 0)
        def _init():
            acc_ref[...] = jnp.zeros_like(acc_ref)

        b1f = b1_ref[...].astype(jnp.float32)   # (1, H)
        w2f = w2_ref[...].astype(jnp.float32)   # (1, H)

        # Per-metapath projection: lane-aligned static slices of the flattened
        # z tile, one (TN, D) @ (D, H) MXU matmul each, f32 accumulation.
        for mm in range(m):
            zd = z_ref[:, mm * d:(mm + 1) * d]                         # (TN, D)
            hid = jnp.dot(zd, w1_ref[...],
                          preferred_element_type=jnp.float32)          # (TN, H) f32
            hw = jnp.tanh(hid + b1f) * w2f                             # EUP + VPU
            acc_ref[:, mm * h:(mm + 1) * h] += jnp.sum(
                hw, axis=0, keepdims=True)                             # sublane reduce

        @pl.when(step == pl.num_programs(0) - 1)
        def _finalize():
            # Fold each H-chunk to its mean metapath score (one-time lane
            # reductions), softmax over the M (1,1) vectors, and write beta
            # already broadcast into the (1, M*D) lane layout of phase 2.
            scores = [
                jnp.sum(acc_ref[:, mm * h:(mm + 1) * h], axis=1,
                        keepdims=True) * inv_n
                for mm in range(m)
            ]
            mx = scores[0]
            for s in scores[1:]:
                mx = jnp.maximum(mx, s)
            exps = [jnp.exp(s - mx) for s in scores]
            den = exps[0]
            for e in exps[1:]:
                den = den + e
            inv_den = 1.0 / den
            for mm in range(m):
                beta_ref[:, mm * d:(mm + 1) * d] = jnp.broadcast_to(
                    exps[mm] * inv_den, (1, d))

    return kernel


def _make_weighted_sum_kernel(m, d):
    def kernel(beta_ref, z_ref, o_ref):
        # out[n, :] = sum_m beta_m * z[n, m, :]; z stays in native dtype, the
        # multiply with f32 beta promotes to f32, single cast at the store.
        acc = z_ref[:, 0:d] * beta_ref[:, 0:d]
        for mm in range(1, m):
            lo = mm * d
            acc = acc + z_ref[:, lo:lo + d] * beta_ref[:, lo:lo + d]
        o_ref[...] = acc.astype(o_ref.dtype)

    return kernel


@functools.partial(jax.jit, static_argnames=("block_n",))
def semantic_attention(z, w1, b1, w2, *, block_n=1024):
    """z: (N, M, D) as in the PyTorch module. Returns (N, D)."""
    N, M, D = z.shape
    H = w1.shape[1]
    MD, MH = M * D, M * H

    tn = _choose_tile(N, block_n)
    nt = N // tn

    # Free row-major collapse -- no HBM transpose pass.
    z_flat = z.reshape(N, MD)
    b1r = b1.reshape(1, H)
    w2r = w2.reshape(1, H)

    vmem_bytes = 32 * 1024 * 1024  # explicit, safe on v5e/v6e/v7x

    # ---- Phase 1: per-metapath attention scores -> lane-expanded beta ------
    beta_lanes = pl.pallas_call(
        _make_scores_kernel(N, M, D, H),
        out_shape=jax.ShapeDtypeStruct((1, MD), jnp.float32),
        grid_spec=pltpu.PrefetchScalarGridSpec(
            num_scalar_prefetch=0,
            grid=(nt,),
            in_specs=[
                pl.BlockSpec((tn, MD), lambda i: (i, 0)),   # z tiles
                pl.BlockSpec((D, H), lambda i: (0, 0)),     # W1 (resident)
                pl.BlockSpec((1, H), lambda i: (0, 0)),     # b1 (resident)
                pl.BlockSpec((1, H), lambda i: (0, 0)),     # w2 (resident)
            ],
            out_specs=pl.BlockSpec((1, MD), lambda i: (0, 0)),
            scratch_shapes=[pltpu.VMEM((1, MH), jnp.float32)],
        ),
        compiler_params=pltpu.CompilerParams(
            dimension_semantics=("arbitrary",),   # score reduction over N tiles
            vmem_limit_bytes=vmem_bytes,
        ),
    )(z_flat, w1, b1r, w2r)

    # ---- Phase 2: memory-bound weighted sum over metapaths -----------------
    out = pl.pallas_call(
        _make_weighted_sum_kernel(M, D),
        out_shape=jax.ShapeDtypeStruct((N, D), z.dtype),
        grid_spec=pltpu.PrefetchScalarGridSpec(
            num_scalar_prefetch=0,
            grid=(nt,),
            in_specs=[
                pl.BlockSpec((1, MD), lambda i: (0, 0)),    # beta (resident)
                pl.BlockSpec((tn, MD), lambda i: (i, 0)),   # z tiles
            ],
            out_specs=pl.BlockSpec((tn, D), lambda i: (i, 0)),
        ),
        compiler_params=pltpu.CompilerParams(
            dimension_semantics=("parallel",),    # independent N tiles (2 TCs on v7x)
            vmem_limit_bytes=vmem_bytes,
        ),
    )(beta_lanes, z_flat)

    return out


def semantic_attention_ref(z, w1, b1, w2):
    """Pure-JAX reference matching the PyTorch forward exactly."""
    h = jnp.tanh(jnp.einsum("nmd,dh->nmh", z, w1) + b1)   # (N, M, H)
    w = jnp.einsum("nmh,ho->nmo", h, w2)                  # (N, M, 1)
    w = w.mean(axis=0)                                    # (M, 1)
    beta = jax.nn.softmax(w, axis=0)                      # (M, 1)
    return (beta[None, :, :] * z).sum(axis=1)             # (N, D)


if __name__ == "__main__":
    # N nodes, M meta-paths, D = in_size, H = hidden_size (module default 128).
    N, M, D, H = 512, 4, 128, 128

    key = jax.random.PRNGKey(0)
    k_z, k_w1, k_b1, k_w2 = jax.random.split(key, 4)

    z = jax.random.normal(k_z, (N, M, D), dtype=jnp.float32)
    # nn.Linear(in_size, hidden) and nn.Linear(hidden, 1, bias=False),
    # stored already transposed so the forward is x @ W.
    w1 = jax.random.normal(k_w1, (D, H), dtype=jnp.float32) * (1.0 / np.sqrt(D))
    b1 = jax.random.normal(k_b1, (H,), dtype=jnp.float32) * 0.1
    w2 = jax.random.normal(k_w2, (H, 1), dtype=jnp.float32) * (1.0 / np.sqrt(H))

    # block_n=128 -> 4-tile grid: exercises the score accumulation and the
    # parallel weighted-sum tiles.
    out = semantic_attention(z, w1, b1, w2, block_n=128)
    out = jax.block_until_ready(out)

    ref = semantic_attention_ref(z, w1, b1, w2)
    np.testing.assert_allclose(np.asarray(out), np.asarray(ref), rtol=1e-4, atol=1e-4)

    print("KERNEL_OK")
</pallas_src>

<mosaic_0001>
module attributes {stable_mosaic.version = 11 : i64} {
  func.func @kernel(%arg0: i32, %arg1: memref<1x512xf32, #tpu.memory_space<vmem>>, %arg2: memref<128x512xf32, #tpu.memory_space<vmem>>, %arg3: memref<128x128xf32, #tpu.memory_space<vmem>>) attributes {dimension_semantics = [#tpu.dimension_semantics<parallel>], iteration_bounds = array<i64: 4>, scalar_prefetch = 0 : i64, scratch_operands = 0 : i64, tpu.core_type = #tpu.core_type<tc>, window_params = [{pipeline_mode = #tpu.pipeline_mode<synchronous>, transform_indices = @transform_0, window_bounds = array<i64: 1, 512>}, {transform_indices = @transform_1, window_bounds = array<i64: 128, 512>}, {transform_indices = @transform_2, window_bounds = array<i64: 128, 128>}]} {
    %c0 = arith.constant 0 : index
    %c0_0 = arith.constant 0 : index
    %0 = vector.load %arg2[%c0, %c0_0] : memref<128x512xf32, #tpu.memory_space<vmem>>, vector<128x128xf32>
    %c0_1 = arith.constant 0 : index
    %c0_2 = arith.constant 0 : index
    %1 = vector.load %arg1[%c0_1, %c0_2] : memref<1x512xf32, #tpu.memory_space<vmem>>, vector<1x128xf32>
    %2 = vector.broadcast %1 : vector<1x128xf32> to vector<128x128xf32>
    %3 = arith.mulf %0, %2 : vector<128x128xf32>
    %c0_3 = arith.constant 0 : index
    %c128 = arith.constant 128 : index
    %4 = vector.load %arg2[%c0_3, %c128] : memref<128x512xf32, #tpu.memory_space<vmem>>, vector<128x128xf32>
    %c0_4 = arith.constant 0 : index
    %c128_5 = arith.constant 128 : index
    %5 = vector.load %arg1[%c0_4, %c128_5] : memref<1x512xf32, #tpu.memory_space<vmem>>, vector<1x128xf32>
    %6 = vector.broadcast %5 : vector<1x128xf32> to vector<128x128xf32>
    %7 = arith.mulf %4, %6 : vector<128x128xf32>
    %8 = arith.addf %3, %7 : vector<128x128xf32>
    %c0_6 = arith.constant 0 : index
    %c256 = arith.constant 256 : index
    %9 = vector.load %arg2[%c0_6, %c256] : memref<128x512xf32, #tpu.memory_space<vmem>>, vector<128x128xf32>
    %c0_7 = arith.constant 0 : index
    %c256_8 = arith.constant 256 : index
    %10 = vector.load %arg1[%c0_7, %c256_8] : memref<1x512xf32, #tpu.memory_space<vmem>>, vector<1x128xf32>
    %11 = vector.broadcast %10 : vector<1x128xf32> to vector<128x128xf32>
    %12 = arith.mulf %9, %11 : vector<128x128xf32>
    %13 = arith.addf %8, %12 : vector<128x128xf32>
    %c0_9 = arith.constant 0 : index
    %c384 = arith.constant 384 : index
    %14 = vector.load %arg2[%c0_9, %c384] : memref<128x512xf32, #tpu.memory_space<vmem>>, vector<128x128xf32>
    %c0_10 = arith.constant 0 : index
    %c384_11 = arith.constant 384 : index
    %15 = vector.load %arg1[%c0_10, %c384_11] : memref<1x512xf32, #tpu.memory_space<vmem>>, vector<1x128xf32>
    %16 = vector.broadcast %15 : vector<1x128xf32> to vector<128x128xf32>
    %17 = arith.mulf %14, %16 : vector<128x128xf32>
    %18 = arith.addf %13, %17 : vector<128x128xf32>
    %c0_12 = arith.constant 0 : index
    %c0_13 = arith.constant 0 : index
    %19 = vector.load %arg3[%c0_12, %c0_13] : memref<128x128xf32, #tpu.memory_space<vmem>>, vector<128x128xf32>
    tpu.vector_store %arg3[%c0_12, %c0_13], %18 {strides = array<i32>} : memref<128x128xf32, #tpu.memory_space<vmem>>, vector<128x128xf32>,
    return
  }
  func.func @transform_0(%arg0: i32) -> (i32, i32) {
    %c0_i32 = arith.constant 0 : i32
    %c0_i32_0 = arith.constant 0 : i32
    %c0_i32_1 = arith.constant 0 : i32
    return %c0_i32, %c0_i32_0 : i32, i32
  }
  func.func @transform_1(%arg0: i32) -> (i32, i32) {
    %c0_i32 = arith.constant 0 : i32
    %c0_i32_0 = arith.constant 0 : i32
    return %arg0, %c0_i32 : i32, i32
  }
  func.func @transform_2(%arg0: i32) -> (i32, i32) {
    %c0_i32 = arith.constant 0 : i32
    %c0_i32_0 = arith.constant 0 : i32
    return %arg0, %c0_i32 : i32, i32
  }
}

module attributes {stable_mosaic.version = 11 : i64} {
  func.func @kernel(%arg0: i32, %arg1: memref<128x512xf32, #tpu.memory_space<vmem>>, %arg2: memref<128x128xf32, #tpu.memory_space<vmem>>, %arg3: memref<1x128xf32, #tpu.memory_space<vmem>>, %arg4: memref<1x128xf32, #tpu.memory_space<vmem>>, %arg5: memref<1x512xf32, #tpu.memory_space<vmem>>, %arg6: memref<1x512xf32, #tpu.memory_space<vmem>>) attributes {dimension_semantics = [#tpu.dimension_semantics<arbitrary>], iteration_bounds = array<i64: 4>, scalar_prefetch = 0 : i64, scratch_operands = 1 : i64, tpu.core_type = #tpu.core_type<tc>, window_params = [{transform_indices = @transform_0, window_bounds = array<i64: 128, 512>}, {pipeline_mode = #tpu.pipeline_mode<synchronous>, transform_indices = @transform_1, window_bounds = array<i64: 128, 128>}, {pipeline_mode = #tpu.pipeline_mode<synchronous>, transform_indices = @transform_2, window_bounds = array<i64: 1, 128>}, {pipeline_mode = #tpu.pipeline_mode<synchronous>, transform_indices = @transform_3, window_bounds = array<i64: 1, 128>}, {pipeline_mode = #tpu.pipeline_mode<synchronous>, transform_indices = @transform_4, window_bounds = array<i64: 1, 512>}]} {
    %c0_i32 = arith.constant 0 : i32
    %0 = arith.cmpi eq, %arg0, %c0_i32 : i32
    %1 = arith.extui %0 : i1 to i32
    %c0_i32_0 = arith.constant 0 : i32
    %2 = arith.cmpi ne, %1, %c0_i32_0 : i32
    scf.if %2 {
      %cst_41 = arith.constant 0.000000e+00 : f32
      %60 = vector.broadcast %cst_41 : f32 to vector<1x512xf32>
      %c0_42 = arith.constant 0 : index
      %c0_43 = arith.constant 0 : index
      %61 = vector.load %arg6[%c0_42, %c0_43] : memref<1x512xf32, #tpu.memory_space<vmem>>, vector<1x512xf32>
      tpu.vector_store %arg6[%c0_42, %c0_43], %60 {strides = array<i32>} : memref<1x512xf32, #tpu.memory_space<vmem>>, vector<1x512xf32>,
    } else {
    }
    %c0 = arith.constant 0 : index
    %c0_1 = arith.constant 0 : index
    %3 = vector.load %arg3[%c0, %c0_1] : memref<1x128xf32, #tpu.memory_space<vmem>>, vector<1x128xf32>
    %c0_2 = arith.constant 0 : index
    %c0_3 = arith.constant 0 : index
    %4 = vector.load %arg4[%c0_2, %c0_3] : memref<1x128xf32, #tpu.memory_space<vmem>>, vector<1x128xf32>
    %c0_4 = arith.constant 0 : index
    %c0_5 = arith.constant 0 : index
    %5 = vector.load %arg1[%c0_4, %c0_5] : memref<128x512xf32, #tpu.memory_space<vmem>>, vector<128x128xf32>
    %c0_6 = arith.constant 0 : index
    %c0_7 = arith.constant 0 : index
    %6 = vector.load %arg2[%c0_6, %c0_7] : memref<128x128xf32, #tpu.memory_space<vmem>>, vector<128x128xf32>
    %cst = arith.constant dense<0.000000e+00> : vector<128x128xf32>
    %7 = tpu.matmul %5, %6, %cst {dimension_numbers = #tpu.dot_dimension_numbers<[1], [0], [0], [1], [0, 0, 1, 1], [], []>} : vector<128x128xf32>, vector<128x128xf32>, vector<128x128xf32> -> vector<128x128xf32>
    %8 = vector.broadcast %3 : vector<1x128xf32> to vector<128x128xf32>
    %9 = arith.addf %7, %8 : vector<128x128xf32>
    %10 = math.tanh %9 : vector<128x128xf32>
    %11 = vector.broadcast %4 : vector<1x128xf32> to vector<128x128xf32>
    %12 = arith.mulf %10, %11 : vector<128x128xf32>
    %c0_8 = arith.constant 0 : index
    %c0_9 = arith.constant 0 : index
    %13 = vector.load %arg6[%c0_8, %c0_9] : memref<1x512xf32, #tpu.memory_space<vmem>>, vector<1x128xf32>
    %cst_10 = arith.constant dense<0.000000e+00> : vector<128xf32>
    %14 = vector.multi_reduction <add>, %12, %cst_10 [0] : vector<128x128xf32> to vector<128xf32>
    %15 = vector.shape_cast %14 : vector<128xf32> to vector<1x128xf32>
    %16 = arith.addf %13, %15 : vector<1x128xf32>
    %c0_11 = arith.constant 0 : index
    %c0_12 = arith.constant 0 : index
    %17 = vector.load %arg6[%c0_11, %c0_12] : memref<1x512xf32, #tpu.memory_space<vmem>>, vector<1x128xf32>
    tpu.vector_store %arg6[%c0_11, %c0_12], %16 {strides = array<i32>} : memref<1x512xf32, #tpu.memory_space<vmem>>, vector<1x128xf32>,
    %c0_13 = arith.constant 0 : index
    %c128 = arith.constant 128 : index
    %18 = vector.load %arg1[%c0_13, %c128] : memref<128x512xf32, #tpu.memory_space<vmem>>, vector<128x128xf32>
    %c0_14 = arith.constant 0 : index
    %c0_15 = arith.constant 0 : index
    %19 = vector.load %arg2[%c0_14, %c0_15] : memref<128x128xf32, #tpu.memory_space<vmem>>, vector<128x128xf32>
    %cst_16 = arith.constant dense<0.000000e+00> : vector<128x128xf32>
    %20 = tpu.matmul %18, %19, %cst_16 {dimension_numbers = #tpu.dot_dimension_numbers<[1], [0], [0], [1], [0, 0, 1, 1], [], []>} : vector<128x128xf32>, vector<128x128xf32>, vector<128x128xf32> -> vector<128x128xf32>
    %21 = vector.broadcast %3 : vector<1x128xf32> to vector<128x128xf32>
    %22 = arith.addf %20, %21 : vector<128x128xf32>
    %23 = math.tanh %22 : vector<128x128xf32>
    %24 = vector.broadcast %4 : vector<1x128xf32> to vector<128x128xf32>
    %25 = arith.mulf %23, %24 : vector<128x128xf32>
    %c0_17 = arith.constant 0 : index
    %c128_18 = arith.constant 128 : index
    %26 = vector.load %arg6[%c0_17, %c128_18] : memref<1x512xf32, #tpu.memory_space<vmem>>, vector<1x128xf32>
    %cst_19 = arith.constant dense<0.000000e+00> : vector<128xf32>
    %27 = vector.multi_reduction <add>, %25, %cst_19 [0] : vector<128x128xf32> to vector<128xf32>
    %28 = vector.shape_cast %27 : vector<128xf32> to vector<1x128xf32>
    %29 = arith.addf %26, %28 : vector<1x128xf32>
    %c0_20 = arith.constant 0 : index
    %c128_21 = arith.constant 128 : index
    %30 = vector.load %arg6[%c0_20, %c128_21] : memref<1x512xf32, #tpu.memory_space<vmem>>, vector<1x128xf32>
    tpu.vector_store %arg6[%c0_20, %c128_21], %29 {strides = array<i32>} : memref<1x512xf32, #tpu.memory_space<vmem>>, vector<1x128xf32>,
    %c0_22 = arith.constant 0 : index
    %c256 = arith.constant 256 : index
    %31 = vector.load %arg1[%c0_22, %c256] : memref<128x512xf32, #tpu.memory_space<vmem>>, vector<128x128xf32>
    %c0_23 = arith.constant 0 : index
    %c0_24 = arith.constant 0 : index
    %32 = vector.load %arg2[%c0_23, %c0_24] : memref<128x128xf32, #tpu.memory_space<vmem>>, vector<128x128xf32>
    %cst_25 = arith.constant dense<0.000000e+00> : vector<128x128xf32>
    %33 = tpu.matmul %31, %32, %cst_25 {dimension_numbers = #tpu.dot_dimension_numbers<[1], [0], [0], [1], [0, 0, 1, 1], [], []>} : vector<128x128xf32>, vector<128x128xf32>, vector<128x128xf32> -> vector<128x128xf32>
    %34 = vector.broadcast %3 : vector<1x128xf32> to vector<128x128xf32>
    %35 = arith.addf %33, %34 : vector<128x128xf32>
    %36 = math.tanh %35 : vector<128x128xf32>
    %37 = vector.broadcast %4 : vector<1x128xf32> to vector<128x128xf32>
    %38 = arith.mulf %36, %37 : vector<128x128xf32>
    %c0_26 = arith.constant 0 : index
    %c256_27 = arith.constant 256 : index
    %39 = vector.load %arg6[%c0_26, %c256_27] : memref<1x512xf32, #tpu.memory_space<vmem>>, vector<1x128xf32>
    %cst_28 = arith.constant dense<0.000000e+00> : vector<128xf32>
    %40 = vector.multi_reduction <add>, %38, %cst_28 [0] : vector<128x128xf32> to vector<128xf32>
    %41 = vector.shape_cast %40 : vector<128xf32> to vector<1x128xf32>
    %42 = arith.addf %39, %41 : vector<1x128xf32>
    %c0_29 = arith.constant 0 : index
    %c256_30 = arith.constant 256 : index
    %43 = vector.load %arg6[%c0_29, %c256_30] : memref<1x512xf32, #tpu.memory_space<vmem>>, vector<1x128xf32>
    tpu.vector_store %arg6[%c0_29, %c256_30], %42 {strides = array<i32>} : memref<1x512xf32, #tpu.memory_space<vmem>>, vector<1x128xf32>,
    %c0_31 = arith.constant 0 : index
    %c384 = arith.constant 384 : index
    %44 = vector.load %arg1[%c0_31, %c384] : memref<128x512xf32, #tpu.memory_space<vmem>>, vector<128x128xf32>
    %c0_32 = arith.constant 0 : index
    %c0_33 = arith.constant 0 : index
    %45 = vector.load %arg2[%c0_32, %c0_33] : memref<128x128xf32, #tpu.memory_space<vmem>>, vector<128x128xf32>
    %cst_34 = arith.constant dense<0.000000e+00> : vector<128x128xf32>
    %46 = tpu.matmul %44, %45, %cst_34 {dimension_numbers = #tpu.dot_dimension_numbers<[1], [0], [0], [1], [0, 0, 1, 1], [], []>} : vector<128x128xf32>, vector<128x128xf32>, vector<128x128xf32> -> vector<128x128xf32>
    %47 = vector.broadcast %3 : vector<1x128xf32> to vector<128x128xf32>
    %48 = arith.addf %46, %47 : vector<128x128xf32>
    %49 = math.tanh %48 : vector<128x128xf32>
    %50 = vector.broadcast %4 : vector<1x128xf32> to vector<128x128xf32>
    %51 = arith.mulf %49, %50 : vector<128x128xf32>
    %c0_35 = arith.constant 0 : index
    %c384_36 = arith.constant 384 : index
    %52 = vector.load %arg6[%c0_35, %c384_36] : memref<1x512xf32, #tpu.memory_space<vmem>>, vector<1x128xf32>
    %cst_37 = arith.constant dense<0.000000e+00> : vector<128xf32>
    %53 = vector.multi_reduction <add>, %51, %cst_37 [0] : vector<128x128xf32> to vector<128xf32>
    %54 = vector.shape_cast %53 : vector<128xf32> to vector<1x128xf32>
    %55 = arith.addf %52, %54 : vector<1x128xf32>
    %c0_38 = arith.constant 0 : index
    %c384_39 = arith.constant 384 : index
    %56 = vector.load %arg6[%c0_38, %c384_39] : memref<1x512xf32, #tpu.memory_space<vmem>>, vector<1x128xf32>
    tpu.vector_store %arg6[%c0_38, %c384_39], %55 {strides = array<i32>} : memref<1x512xf32, #tpu.memory_space<vmem>>, vector<1x128xf32>,
    %c3_i32 = arith.constant 3 : i32
    %57 = arith.cmpi eq, %arg0, %c3_i32 : i32
    %58 = arith.extui %57 : i1 to i32
    %c0_i32_40 = arith.constant 0 : i32
    %59 = arith.cmpi ne, %58, %c0_i32_40 : i32
    scf.if %59 {
      %c0_41 = arith.constant 0 : index
      %c0_42 = arith.constant 0 : index
      %60 = vector.load %arg6[%c0_41, %c0_42] : memref<1x512xf32, #tpu.memory_space<vmem>>, vector<1x128xf32>
      %cst_43 = arith.constant dense<0.000000e+00> : vector<1xf32>
      %61 = vector.multi_reduction <add>, %60, %cst_43 [1] : vector<1x128xf32> to vector<1xf32>
      %62 = vector.shape_cast %61 : vector<1xf32> to vector<1x1xf32>
      %cst_44 = arith.constant 0.001953125 : f32
      %63 = vector.broadcast %cst_44 : f32 to vector<1x1xf32>
      %64 = arith.mulf %62, %63 : vector<1x1xf32>
      %c0_45 = arith.constant 0 : index
      %c128_46 = arith.constant 128 : index
      %65 = vector.load %arg6[%c0_45, %c128_46] : memref<1x512xf32, #tpu.memory_space<vmem>>, vector<1x128xf32>
      %cst_47 = arith.constant dense<0.000000e+00> : vector<1xf32>
      %66 = vector.multi_reduction <add>, %65, %cst_47 [1] : vector<1x128xf32> to vector<1xf32>
      %67 = vector.shape_cast %66 : vector<1xf32> to vector<1x1xf32>
      %cst_48 = arith.constant 0.001953125 : f32
      %68 = vector.broadcast %cst_48 : f32 to vector<1x1xf32>
      %69 = arith.mulf %67, %68 : vector<1x1xf32>
      %c0_49 = arith.constant 0 : index
      %c256_50 = arith.constant 256 : index
      %70 = vector.load %arg6[%c0_49, %c256_50] : memref<1x512xf32, #tpu.memory_space<vmem>>, vector<1x128xf32>
      %cst_51 = arith.constant dense<0.000000e+00> : vector<1xf32>
      %71 = vector.multi_reduction <add>, %70, %cst_51 [1] : vector<1x128xf32> to vector<1xf32>
      %72 = vector.shape_cast %71 : vector<1xf32> to vector<1x1xf32>
      %cst_52 = arith.constant 0.001953125 : f32
      %73 = vector.broadcast %cst_52 : f32 to vector<1x1xf32>
      %74 = arith.mulf %72, %73 : vector<1x1xf32>
      %c0_53 = arith.constant 0 : index
      %c384_54 = arith.constant 384 : index
      %75 = vector.load %arg6[%c0_53, %c384_54] : memref<1x512xf32, #tpu.memory_space<vmem>>, vector<1x128xf32>
      %cst_55 = arith.constant dense<0.000000e+00> : vector<1xf32>
      %76 = vector.multi_reduction <add>, %75, %cst_55 [1] : vector<1x128xf32> to vector<1xf32>
      %77 = vector.shape_cast %76 : vector<1xf32> to vector<1x1xf32>
      %cst_56 = arith.constant 0.001953125 : f32
      %78 = vector.broadcast %cst_56 : f32 to vector<1x1xf32>
      %79 = arith.mulf %77, %78 : vector<1x1xf32>
      %80 = arith.maximumf %64, %69 : vector<1x1xf32>
      %81 = arith.maximumf %80, %74 : vector<1x1xf32>
      %82 = arith.maximumf %81, %79 : vector<1x1xf32>
      %83 = arith.subf %64, %82 : vector<1x1xf32>
      %84 = math.exp %83 : vector<1x1xf32>
      %85 = arith.subf %69, %82 : vector<1x1xf32>
      %86 = math.exp %85 : vector<1x1xf32>
      %87 = arith.subf %74, %82 : vector<1x1xf32>
      %88 = math.exp %87 : vector<1x1xf32>
      %89 = arith.subf %79, %82 : vector<1x1xf32>
      %90 = math.exp %89 : vector<1x1xf32>
      %91 = arith.addf %84, %86 : vector<1x1xf32>
      %92 = arith.addf %91, %88 : vector<1x1xf32>
      %93 = arith.addf %92, %90 : vector<1x1xf32>
      %cst_57 = arith.constant 1.000000e+00 : f32
      %94 = vector.broadcast %cst_57 : f32 to vector<1x1xf32>
      %95 = arith.divf %94, %93 : vector<1x1xf32>
      %96 = arith.mulf %84, %95 : vector<1x1xf32>
      %97 = vector.shape_cast %96 : vector<1x1xf32> to vector<1x1xf32>
      %98 = vector.broadcast %97 : vector<1x1xf32> to vector<1x128xf32>
      %c0_58 = arith.constant 0 : index
      %c0_59 = arith.constant 0 : index
      %99 = vector.load %arg5[%c0_58, %c0_59] : memref<1x512xf32, #tpu.memory_space<vmem>>, vector<1x128xf32>
      tpu.vector_store %arg5[%c0_58, %c0_59], %98 {strides = array<i32>} : memref<1x512xf32, #tpu.memory_space<vmem>>, vector<1x128xf32>,
      %100 = arith.mulf %86, %95 : vector<1x1xf32>
      %101 = vector.shape_cast %100 : vector<1x1xf32> to vector<1x1xf32>
      %102 = vector.broadcast %101 : vector<1x1xf32> to vector<1x128xf32>
      %c0_60 = arith.constant 0 : index
      %c128_61 = arith.constant 128 : index
      %103 = vector.load %arg5[%c0_60, %c128_61] : memref<1x512xf32, #tpu.memory_space<vmem>>, vector<1x128xf32>
      tpu.vector_store %arg5[%c0_60, %c128_61], %102 {strides = array<i32>} : memref<1x512xf32, #tpu.memory_space<vmem>>, vector<1x128xf32>,
      %104 = arith.mulf %88, %95 : vector<1x1xf32>
      %105 = vector.shape_cast %104 : vector<1x1xf32> to vector<1x1xf32>
      %106 = vector.broadcast %105 : vector<1x1xf32> to vector<1x128xf32>
      %c0_62 = arith.constant 0 : index
      %c256_63 = arith.constant 256 : index
      %107 = vector.load %arg5[%c0_62, %c256_63] : memref<1x512xf32, #tpu.memory_space<vmem>>, vector<1x128xf32>
      tpu.vector_store %arg5[%c0_62, %c256_63], %106 {strides = array<i32>} : memref<1x512xf32, #tpu.memory_space<vmem>>, vector<1x128xf32>,
      %108 = arith.mulf %90, %95 : vector<1x1xf32>
      %109 = vector.shape_cast %108 : vector<1x1xf32> to vector<1x1xf32>
      %110 = vector.broadcast %109 : vector<1x1xf32> to vector<1x128xf32>
      %c0_64 = arith.constant 0 : index
      %c384_65 = arith.constant 384 : index
      %111 = vector.load %arg5[%c0_64, %c384_65] : memref<1x512xf32, #tpu.memory_space<vmem>>, vector<1x128xf32>
      tpu.vector_store %arg5[%c0_64, %c384_65], %110 {strides = array<i32>} : memref<1x512xf32, #tpu.memory_space<vmem>>, vector<1x128xf32>,
    } else {
    }
    return
  }
  func.func @transform_0(%arg0: i32) -> (i32, i32) {
    %c0_i32 = arith.constant 0 : i32
    %c0_i32_0 = arith.constant 0 : i32
    return %arg0, %c0_i32 : i32, i32
  }
  func.func @transform_1(%arg0: i32) -> (i32, i32) {
    %c0_i32 = arith.constant 0 : i32
    %c0_i32_0 = arith.constant 0 : i32
    %c0_i32_1 = arith.constant 0 : i32
    return %c0_i32, %c0_i32_0 : i32, i32
  }
  func.func @transform_2(%arg0: i32) -> (i32, i32) {
    %c0_i32 = arith.constant 0 : i32
    %c0_i32_0 = arith.constant 0 : i32
    %c0_i32_1 = arith.constant 0 : i32
    return %c0_i32, %c0_i32_0 : i32, i32
  }
  func.func @transform_3(%arg0: i32) -> (i32, i32) {
    %c0_i32 = arith.constant 0 : i32
    %c0_i32_0 = arith.constant 0 : i32
    %c0_i32_1 = arith.constant 0 : i32
    return %c0_i32, %c0_i32_0 : i32, i32
  }
  func.func @transform_4(%arg0: i32) -> (i32, i32) {
    %c0_i32 = arith.constant 0 : i32
    %c0_i32_0 = arith.constant 0 : i32
    %c0_i32_1 = arith.constant 0 : i32
    return %c0_i32, %c0_i32_0 : i32, i32
  }
}

</mosaic_0001>

<llo_original>
// kernel: semantic_attention.3
$region0: #{semantic_attention.3}
  #allocation0 [shape = 'u32[]', space=smem, size = 0x4, offset = 0x4, fixed_abs, tag = 'smem constant byte address 0x4 - core index']
  #allocation1 [shape = 'u32[144,128]{1,0:T(1,128)}', space=vmem, size = 0x12000, scoped, tag = 'internal scratch']
  %s0 = inlined_call_operand.vmem [shape: f32[1,512], index: 0, kind: input, shape index: {}]
  %s1 = inlined_call_operand.vmem [shape: f32[512,512], index: 1, kind: input, shape index: {}]
  %s2 = inlined_call_operand.hbm [shape: f32[512,128], index: 2, kind: output, shape index: {}]
  %s3 = sld [smem:[#allocation0]]
  $region41: #{semantic_attention.3} parent=0
    _
  %s5 = ssub.s32 1, %s3
  %s6 = scalar_select 0, %s5, %s3
  $region1: #{semantic_attention.3} parent=0
    #allocation2 [shape = 'u8[131072]{0}', space=vmem, size = 0x20000, scoped, tag = 'output window, operand 0']
    #allocation3 [shape = 's32[2]{0}', space=sflag, size = 0x8, scoped, tag = 'scoped memory for semantic_attention.3']
    %7 = vsyncpa [#allocation3], 0
    %s8 = scalar_lea.sflag [#allocation3], 1
    %9 = vsyncpa %s8, 0
    loop: start=0, step=1, limit=6
    $region2: #{semantic_attention.3} parent=1 // loop_pre_header
      _
    $region3: #{semantic_attention.3} parent=1 // loop_header
      %s11 = sphi 0, %s15
      %p12 = scmp.ge.s32.totalorder %s11, 6
      %s19 = sphi 0, %s19
      %s21 = sphi 0, %s19
      %s22 = sphi 0, %s21
      %s36 = sphi 0, %s22
      %s42 = sphi 0, %s44
      %s45 = sphi 0, %s42
      %s46 = sphi 0, %s45
      %s62 = sphi 0, %s46
      %s68 = sphi 0, %s70
      %s71 = sphi 0, %s68
      %s72 = sphi 0, %s71
      %s88 = sphi 0, %s72
    $region4: #{semantic_attention.3} parent=1 // loop_header_branch
      %14 = sbr.rel (%p12) target = $region8
    $region5: #{semantic_attention.3} parent=1 // loop_body
      %s16 = ssub.s32 %s11, 1
      %s17 = ssub.s32 %s11, 2
      %s18 = sadd.s32 %s11, 1
      %s20 = sadd.s32 %s19, 1
      %p23 = scmp.eq.s32.totalorder %s11, 3
      %p24 = scmp.ne.s32.totalorder %s19, %s21
      %p25 = scmp.eq.s32.totalorder %s11, 0
      %p26 = por %p24, %p25
      %p27 = scmp.ne.s32.totalorder %s19, %s21
      %p28 = scmp.eq.s32.totalorder %s16, 3
      %p29 = por %p27, %p28
      %p30 = scmp.ne.s32.totalorder %s21, %s22
      %p31 = scmp.eq.s32.totalorder %s16, 0
      %p32 = por %p30, %p31
      %p33 = scmp.ne.s32.totalorder %s21, %s22
      %p34 = scmp.eq.s32.totalorder %s17, 3
      %p35 = por %p33, %p34
      %p37 = scmp.ne.s32.totalorder %s22, %s36
      %p38 = scmp.eq.s32.totalorder %s17, 0
      %p39 = por %p37, %p38
      %s40 = ssub.s32 %s11, %s18
      %p41 = scmp.eq.s32.totalorder %s40, 0
      %s43 = sadd.s32 %s42, 1
      %s44 = scalar_select %p41, %s42, %s43
      %p47 = pneg %p41
      %p48 = scmp.eq.s32.totalorder %s11, 3
      %p49 = por %p47, %p48
      %p50 = scmp.ne.s32.totalorder %s42, %s45
      %p51 = scmp.eq.s32.totalorder %s11, 0
      %p52 = por %p50, %p51
      %p53 = scmp.ne.s32.totalorder %s42, %s45
      %p54 = scmp.eq.s32.totalorder %s16, 3
      %p55 = por %p53, %p54
      %p56 = scmp.ne.s32.totalorder %s45, %s46
      %p57 = scmp.eq.s32.totalorder %s16, 0
      %p58 = por %p56, %p57
      %p59 = scmp.ne.s32.totalorder %s45, %s46
      %p60 = scmp.eq.s32.totalorder %s17, 3
      %p61 = por %p59, %p60
      %p63 = scmp.ne.s32.totalorder %s46, %s62
      %p64 = scmp.eq.s32.totalorder %s17, 0
      %p65 = por %p63, %p64
      %s66 = ssub.s32 %s11, %s18
      %p67 = scmp.eq.s32.totalorder %s66, 0
      %s69 = sadd.s32 %s68, 1
      %s70 = scalar_select %p67, %s68, %s69
      %p73 = pneg %p67
      %p74 = scmp.eq.s32.totalorder %s11, 3
      %p75 = por %p73, %p74
      %p76 = scmp.ne.s32.totalorder %s68, %s71
      %p77 = scmp.eq.s32.totalorder %s11, 0
      %p78 = por %p76, %p77
      %p79 = scmp.ne.s32.totalorder %s68, %s71
      %p80 = scmp.eq.s32.totalorder %s16, 3
      %p81 = por %p79, %p80
      %p82 = scmp.ne.s32.totalorder %s71, %s72
      %p83 = scmp.eq.s32.totalorder %s16, 0
      %p84 = por %p82, %p83
      %p85 = scmp.ne.s32.totalorder %s71, %s72
      %p86 = scmp.eq.s32.totalorder %s17, 3
      %p87 = por %p85, %p86
      %p89 = scmp.ne.s32.totalorder %s72, %s88
      %p90 = scmp.eq.s32.totalorder %s17, 0
      %p91 = por %p89, %p90
      %p92 = scmp.le.s32.totalorder 1, %s11
      %p93 = scmp.lt.s32.totalorder %s11, 5
      %p94 = pnand %p92, %p93
      %p95 = pneg %p94
      // Predicated region
      $region9: #{semantic_attention.3} parent=5 // pred_check
        _
      $region10: #{semantic_attention.3} parent=5 // pred_check_branch
        %97 = sbr.rel (%p94) target = $region12
      $region11: #{semantic_attention.3} parent=5 // pred_region
        %s98 = ssub.s32 %s11, 1
        // Predicated region
        $region13: #{semantic_attention.3} parent=11 // pred_check
          %p99 = pneg %p32
        $region14: #{semantic_attention.3} parent=11 // pred_check_branch
          %101 = sbr.rel (%p99) target = $region16
        $region15: #{semantic_attention.3} parent=11 // pred_region
          _
        $region16: #{semantic_attention.3} parent=11 // pred_fallthru
          _
      $region12: #{semantic_attention.3} parent=5 // pred_fallthru
        _
      %p102 = scmp.lt.s32.totalorder %s11, 4
      // Predicated region
      $region17: #{semantic_attention.3} parent=5 // pred_check
        %p103 = pneg %p102
      $region18: #{semantic_attention.3} parent=5 // pred_check_branch
        %105 = sbr.rel (%p103) target = $region20
      $region19: #{semantic_attention.3} parent=5 // pred_region
        // Predicated region
        $region21: #{semantic_attention.3} parent=19 // pred_check
          %p106 = pneg %p52
        $region22: #{semantic_attention.3} parent=19 // pred_check_branch
          %108 = sbr.rel (%p106) target = $region24
        $region23: #{semantic_attention.3} parent=19 // pred_region
          %s109 = smul.u32 16, %s11
          %p110 = scmp.lt.s32.totalorder %s109, 63
          %s111 = scalar_select %p110, %s109, 63
          %s112 = smul.addr %s111, 4
          %s113 = smul.addr %s112, 8
          %s114 = scalar_lea.vmem %s1, %s113
          %s115 = smul.u32 16, %s11
        $region24: #{semantic_attention.3} parent=19 // pred_fallthru
          _
      $region20: #{semantic_attention.3} parent=5 // pred_fallthru
        _
      %p116 = scmp.le.s32.totalorder 1, %s11
      %p117 = scmp.lt.s32.totalorder %s11, 5
      %p118 = pnand %p116, %p117
      %p119 = pneg %p118
      // Predicated region
      $region25: #{semantic_attention.3} parent=5 // pred_check
        _
      $region26: #{semantic_attention.3} parent=5 // pred_check_branch
        %121 = sbr.rel (%p118) target = $region28
      $region27: #{semantic_attention.3} parent=5 // pred_region
        %s122 = ssub.s32 %s11, 1
        %p123 = pneg %p32
        %p124 = pneg %p29
        %s125 = smul.u32 16, %s16
        %p126 = scmp.lt.s32.totalorder %s125, 63
        %s127 = scalar_select %p126, %s125, 63
        %s128 = smul.addr %s127, 4
        %s129 = smul.addr %s128, 8
        %s130 = scalar_lea.vmem %s1, %s129
        %p131 = pneg %p58
        %p132 = pneg %p55
        %p133 = pneg %p84
        %p134 = pneg %p81
        %s135 = sand.u32 %s71, 1
        %s136 = scalar_lea.sflag [#allocation3], %s135
        %s137 = sand.u32 %s71, 1
        %s138 = smul.addr %s137, 128
        %s139 = scalar_lea.vmem [#allocation2], %s138
        %s140 = smul.u32 16, %s16
        %p141 = scmp.lt.s32.totalorder %s140, 63
        %s142 = scalar_select %p141, %s140, 63
        %s143 = smul.addr %s142, 4
        %s144 = smul.addr %s143, 8
        %s145 = scalar_lea.vmem %s1, %s144
        %s146 = smul.u32 16, %s16
        %s147 = smul.u32 16, %s16
        %v148 = vld [vmem:[%s145] sm:$0xff]
        %v149 = vld [vmem:[%s145 + $0x20] sm:$0xff]
        %v150 = vld [vmem:[%s145 + $0x40] sm:$0xff]
        %v151 = vld [vmem:[%s145 + $0x60] sm:$0xff]
        %v152 = vld [vmem:[%s145 + $0x80] sm:$0xff]
        %v153 = vld [vmem:[%s145 + $0xa0] sm:$0xff]
        %v154 = vld [vmem:[%s145 + $0xc0] sm:$0xff]
        %v155 = vld [vmem:[%s145 + $0xe0] sm:$0xff]
        %v156 = vld [vmem:[%s145 + $0x100] sm:$0xff]
        %v157 = vld [vmem:[%s145 + $0x120] sm:$0xff]
        %v158 = vld [vmem:[%s145 + $0x140] sm:$0xff]
        %v159 = vld [vmem:[%s145 + $0x160] sm:$0xff]
        %v160 = vld [vmem:[%s145 + $0x180] sm:$0xff]
        %v161 = vld [vmem:[%s145 + $0x1a0] sm:$0xff]
        %v162 = vld [vmem:[%s145 + $0x1c0] sm:$0xff]
        %v163 = vld [vmem:[%s145 + $0x1e0] sm:$0xff]
        %v164 = vld [vmem:[%s0] sm:$0x1]
        %v166 = vlaneseq
        %v167 = vshrl.u32 %v166, 7
        %v168 = vsub.s32 0, %v167
        %v169 = vrot.slane %v164, %v168
        %v171 = vmul.f32 %v148, %v169
        %v172 = vmul.f32 %v149, %v169
        %v173 = vmul.f32 %v150, %v169
        %v174 = vmul.f32 %v151, %v169
        %v175 = vmul.f32 %v152, %v169
        %v176 = vmul.f32 %v153, %v169
        %v177 = vmul.f32 %v154, %v169
        %v178 = vmul.f32 %v155, %v169
        %v179 = vmul.f32 %v156, %v169
        %v180 = vmul.f32 %v157, %v169
        %v181 = vmul.f32 %v158, %v169
        %v182 = vmul.f32 %v159, %v169
        %v183 = vmul.f32 %v160, %v169
        %v184 = vmul.f32 %v161, %v169
        %v185 = vmul.f32 %v162, %v169
        %v186 = vmul.f32 %v163, %v169
        %v187 = vld [vmem:[%s145 + $0x8] sm:$0xff]
        %v188 = vld [vmem:[%s145 + $0x28] sm:$0xff]
        %v189 = vld [vmem:[%s145 + $0x48] sm:$0xff]
        %v190 = vld [vmem:[%s145 + $0x68] sm:$0xff]
        %v191 = vld [vmem:[%s145 + $0x88] sm:$0xff]
        %v192 = vld [vmem:[%s145 + $0xa8] sm:$0xff]
        %v193 = vld [vmem:[%s145 + $0xc8] sm:$0xff]
        %v194 = vld [vmem:[%s145 + $0xe8] sm:$0xff]
        %v195 = vld [vmem:[%s145 + $0x108] sm:$0xff]
        %v196 = vld [vmem:[%s145 + $0x128] sm:$0xff]
        %v197 = vld [vmem:[%s145 + $0x148] sm:$0xff]
        %v198 = vld [vmem:[%s145 + $0x168] sm:$0xff]
        %v199 = vld [vmem:[%s145 + $0x188] sm:$0xff]
        %v200 = vld [vmem:[%s145 + $0x1a8] sm:$0xff]
        %v201 = vld [vmem:[%s145 + $0x1c8] sm:$0xff]
        %v202 = vld [vmem:[%s145 + $0x1e8] sm:$0xff]
        %v203 = vld [vmem:[%s0 + $0x1] sm:$0x1]
        %v205 = vlaneseq
        %v206 = vshrl.u32 %v205, 7
        %v207 = vsub.s32 0, %v206
        %v208 = vrot.slane %v203, %v207
        %v210 = vmul.f32 %v187, %v208
        %v211 = vmul.f32 %v188, %v208
        %v212 = vmul.f32 %v189, %v208
        %v213 = vmul.f32 %v190, %v208
        %v214 = vmul.f32 %v191, %v208
        %v215 = vmul.f32 %v192, %v208
        %v216 = vmul.f32 %v193, %v208
        %v217 = vmul.f32 %v194, %v208
        %v218 = vmul.f32 %v195, %v208
        %v219 = vmul.f32 %v196, %v208
        %v220 = vmul.f32 %v197, %v208
        %v221 = vmul.f32 %v198, %v208
        %v222 = vmul.f32 %v199, %v208
        %v223 = vmul.f32 %v200, %v208
        %v224 = vmul.f32 %v201, %v208
        %v225 = vmul.f32 %v202, %v208
        %v226 = vadd.f32 %v171, %v210
        %v227 = vadd.f32 %v172, %v211
        %v228 = vadd.f32 %v173, %v212
        %v229 = vadd.f32 %v174, %v213
        %v230 = vadd.f32 %v175, %v214
        %v231 = vadd.f32 %v176, %v215
        %v232 = vadd.f32 %v177, %v216
        %v233 = vadd.f32 %v178, %v217
        %v234 = vadd.f32 %v179, %v218
        %v235 = vadd.f32 %v180, %v219
        %v236 = vadd.f32 %v181, %v220
        %v237 = vadd.f32 %v182, %v221
        %v238 = vadd.f32 %v183, %v222
        %v239 = vadd.f32 %v184, %v223
        %v240 = vadd.f32 %v185, %v224
        %v241 = vadd.f32 %v186, %v225
        %v242 = vld [vmem:[%s145 + $0x10] sm:$0xff]
        %v243 = vld [vmem:[%s145 + $0x30] sm:$0xff]
        %v244 = vld [vmem:[%s145 + $0x50] sm:$0xff]
        %v245 = vld [vmem:[%s145 + $0x70] sm:$0xff]
        %v246 = vld [vmem:[%s145 + $0x90] sm:$0xff]
        %v247 = vld [vmem:[%s145 + $0xb0] sm:$0xff]
        %v248 = vld [vmem:[%s145 + $0xd0] sm:$0xff]
        %v249 = vld [vmem:[%s145 + $0xf0] sm:$0xff]
        %v250 = vld [vmem:[%s145 + $0x110] sm:$0xff]
        %v251 = vld [vmem:[%s145 + $0x130] sm:$0xff]
        %v252 = vld [vmem:[%s145 + $0x150] sm:$0xff]
        %v253 = vld [vmem:[%s145 + $0x170] sm:$0xff]
        %v254 = vld [vmem:[%s145 + $0x190] sm:$0xff]
        %v255 = vld [vmem:[%s145 + $0x1b0] sm:$0xff]
        %v256 = vld [vmem:[%s145 + $0x1d0] sm:$0xff]
        %v257 = vld [vmem:[%s145 + $0x1f0] sm:$0xff]
        %v258 = vld [vmem:[%s0 + $0x2] sm:$0x1]
        %v260 = vlaneseq
        %v261 = vshrl.u32 %v260, 7
        %v262 = vsub.s32 0, %v261
        %v263 = vrot.slane %v258, %v262
        %v265 = vmul.f32 %v242, %v263
        %v266 = vmul.f32 %v243, %v263
        %v267 = vmul.f32 %v244, %v263
        %v268 = vmul.f32 %v245, %v263
        %v269 = vmul.f32 %v246, %v263
        %v270 = vmul.f32 %v247, %v263
        %v271 = vmul.f32 %v248, %v263
        %v272 = vmul.f32 %v249, %v263
        %v273 = vmul.f32 %v250, %v263
        %v274 = vmul.f32 %v251, %v263
        %v275 = vmul.f32 %v252, %v263
        %v276 = vmul.f32 %v253, %v263
        %v277 = vmul.f32 %v254, %v263
        %v278 = vmul.f32 %v255, %v263
        %v279 = vmul.f32 %v256, %v263
        %v280 = vmul.f32 %v257, %v263
        %v281 = vadd.f32 %v226, %v265
        %v282 = vadd.f32 %v227, %v266
        %v283 = vadd.f32 %v228, %v267
        %v284 = vadd.f32 %v229, %v268
        %v285 = vadd.f32 %v230, %v269
        %v286 = vadd.f32 %v231, %v270
        %v287 = vadd.f32 %v232, %v271
        %v288 = vadd.f32 %v233, %v272
        %v289 = vadd.f32 %v234, %v273
        %v290 = vadd.f32 %v235, %v274
        %v291 = vadd.f32 %v236, %v275
        %v292 = vadd.f32 %v237, %v276
        %v293 = vadd.f32 %v238, %v277
        %v294 = vadd.f32 %v239, %v278
        %v295 = vadd.f32 %v240, %v279
        %v296 = vadd.f32 %v241, %v280
        %v297 = vld [vmem:[%s145 + $0x18] sm:$0xff]
        %v298 = vld [vmem:[%s145 + $0x38] sm:$0xff]
        %v299 = vld [vmem:[%s145 + $0x58] sm:$0xff]
        %v300 = vld [vmem:[%s145 + $0x78] sm:$0xff]
        %v301 = vld [vmem:[%s145 + $0x98] sm:$0xff]
        %v302 = vld [vmem:[%s145 + $0xb8] sm:$0xff]
        %v303 = vld [vmem:[%s145 + $0xd8] sm:$0xff]
        %v304 = vld [vmem:[%s145 + $0xf8] sm:$0xff]
        %v305 = vld [vmem:[%s145 + $0x118] sm:$0xff]
        %v306 = vld [vmem:[%s145 + $0x138] sm:$0xff]
        %v307 = vld [vmem:[%s145 + $0x158] sm:$0xff]
        %v308 = vld [vmem:[%s145 + $0x178] sm:$0xff]
        %v309 = vld [vmem:[%s145 + $0x198] sm:$0xff]
        %v310 = vld [vmem:[%s145 + $0x1b8] sm:$0xff]
        %v311 = vld [vmem:[%s145 + $0x1d8] sm:$0xff]
        %v312 = vld [vmem:[%s145 + $0x1f8] sm:$0xff]
        %v313 = vld [vmem:[%s0 + $0x3] sm:$0x1]
        %v315 = vlaneseq
        %v316 = vshrl.u32 %v315, 7
        %v317 = vsub.s32 0, %v316
        %v318 = vrot.slane %v313, %v317
        %v320 = vmul.f32 %v297, %v318
        %v321 = vmul.f32 %v298, %v318
        %v322 = vmul.f32 %v299, %v318
        %v323 = vmul.f32 %v300, %v318
        %v324 = vmul.f32 %v301, %v318
        %v325 = vmul.f32 %v302, %v318
        %v326 = vmul.f32 %v303, %v318
        %v327 = vmul.f32 %v304, %v318
        %v328 = vmul.f32 %v305, %v318
        %v329 = vmul.f32 %v306, %v318
        %v330 = vmul.f32 %v307, %v318
        %v331 = vmul.f32 %v308, %v318
        %v332 = vmul.f32 %v309, %v318
        %v333 = vmul.f32 %v310, %v318
        %v334 = vmul.f32 %v311, %v318
        %v335 = vmul.f32 %v312, %v318
        %v336 = vadd.f32 %v281, %v320
        %v337 = vadd.f32 %v282, %v321
        %v338 = vadd.f32 %v283, %v322
        %v339 = vadd.f32 %v284, %v323
        %v340 = vadd.f32 %v285, %v324
        %v341 = vadd.f32 %v286, %v325
        %v342 = vadd.f32 %v287, %v326
        %v343 = vadd.f32 %v288, %v327
        %v344 = vadd.f32 %v289, %v328
        %v345 = vadd.f32 %v290, %v329
        %v346 = vadd.f32 %v291, %v330
        %v347 = vadd.f32 %v292, %v331
        %v348 = vadd.f32 %v293, %v332
        %v349 = vadd.f32 %v294, %v333
        %v350 = vadd.f32 %v295, %v334
        %v351 = vadd.f32 %v296, %v335
        %352 = vst [vmem:[%s139] sm:$0xff] %v336
        %353 = vst [vmem:[%s139 + $0x8] sm:$0xff] %v337
        %354 = vst [vmem:[%s139 + $0x10] sm:$0xff] %v338
        %355 = vst [vmem:[%s139 + $0x18] sm:$0xff] %v339
        %356 = vst [vmem:[%s139 + $0x20] sm:$0xff] %v340
        %357 = vst [vmem:[%s139 + $0x28] sm:$0xff] %v341
        %358 = vst [vmem:[%s139 + $0x30] sm:$0xff] %v342
        %359 = vst [vmem:[%s139 + $0x38] sm:$0xff] %v343
        %360 = vst [vmem:[%s139 + $0x40] sm:$0xff] %v344
        %361 = vst [vmem:[%s139 + $0x48] sm:$0xff] %v345
        %362 = vst [vmem:[%s139 + $0x50] sm:$0xff] %v346
        %363 = vst [vmem:[%s139 + $0x58] sm:$0xff] %v347
        %364 = vst [vmem:[%s139 + $0x60] sm:$0xff] %v348
        %365 = vst [vmem:[%s139 + $0x68] sm:$0xff] %v349
        %366 = vst [vmem:[%s139 + $0x70] sm:$0xff] %v350
        %367 = vst [vmem:[%s139 + $0x78] sm:$0xff] %v351
        %s368 = sand.u32 %s71, 1
        %s369 = scalar_lea.sflag [#allocation3], %s368
        %s370 = sand.u32 %s71, 1
        %s371 = smul.addr %s370, 128
        %s372 = scalar_lea.vmem [#allocation2], %s371
        // Predicated region
        $region29: #{semantic_attention.3} parent=27 // pred_check
          %p373 = pneg %p81
        $region30: #{semantic_attention.3} parent=27 // pred_check_branch
          %375 = sbr.rel (%p373) target = $region32
        $region31: #{semantic_attention.3} parent=27 // pred_region
          %s376 = smul.u32 16, %s16
          %s378 = ssub.s32 2048, 2048
          %379 = vsyncadd %s369, %s378
          %s380 = smul.addr %s376, 128
          %s381 = scalar_lea.hbm %s2, %s380
          %s382 = sshll.u32 %s372, 4
          %s383 = int_to_ptr.vmem [resolvable:$true] %s382
          %388 = dma.vmem_to_hbm [thread:$0]  %s383, 2048, %s381, %s369, 128, 128, 8
        $region32: #{semantic_attention.3} parent=27 // pred_fallthru
          _
      $region28: #{semantic_attention.3} parent=5 // pred_fallthru
        _
      %p389 = scmp.le.s32.totalorder 2, %s11
      // Predicated region
      $region33: #{semantic_attention.3} parent=5 // pred_check
        %p390 = pneg %p389
      $region34: #{semantic_attention.3} parent=5 // pred_check_branch
        %392 = sbr.rel (%p390) target = $region36
      $region35: #{semantic_attention.3} parent=5 // pred_region
        %s393 = ssub.s32 %s11, 2
        // Predicated region
        $region37: #{semantic_attention.3} parent=35 // pred_check
          %p394 = pneg %p87
        $region38: #{semantic_attention.3} parent=35 // pred_check_branch
          %396 = sbr.rel (%p394) target = $region40
        $region39: #{semantic_attention.3} parent=35 // pred_region
          %s397 = sand.u32 %s72, 1
          %s398 = scalar_lea.sflag [#allocation3], %s397
          %s399 = sand.u32 %s72, 1
          %s400 = smul.addr %s399, 128
          %s401 = scalar_lea.vmem [#allocation2], %s400
          %402 = dma.done %s398, 2048
        $region40: #{semantic_attention.3} parent=35 // pred_fallthru
          _
      $region36: #{semantic_attention.3} parent=5 // pred_fallthru
        _
    $region6: #{semantic_attention.3} parent=1 // loop_footer
      %s15 = sadd.s32 1, %s11
    $region7: #{semantic_attention.3} parent=1 // loop_footer_branch
      %10 = sbr.rel target = $region3
    $region8: #{semantic_attention.3} parent=1 // loop_exit
      _
    %403 = vsyncpa [#allocation3], 1
    %s404 = scalar_lea.sflag [#allocation3], 1
    %405 = vsyncpa %s404, 1

// kernel: semantic_attention.2
$region0: #{semantic_attention.2}
  #allocation0 [shape = 'u32[]', space=smem, size = 0x4, offset = 0x4, fixed_abs, tag = 'smem constant byte address 0x4 - core index']
  #allocation1 [shape = 'u32[144,128]{1,0:T(1,128)}', space=vmem, size = 0x12000, scoped, tag = 'internal scratch']
  #allocation2 [shape = 'f32[1,512]{1,0:T(1,128)}', space=vmem, size = 0x800, scoped, tag = 'scratch operand']
  %s0 = inlined_call_operand.vmem [shape: f32[512,512], index: 0, kind: input, shape index: {}]
  %s1 = inlined_call_operand.vmem [shape: f32[128,128], index: 1, kind: input, shape index: {}]
  %s2 = inlined_call_operand.vmem [shape: f32[1,128], index: 2, kind: input, shape index: {}]
  %s3 = inlined_call_operand.vmem [shape: f32[1,128], index: 3, kind: input, shape index: {}]
  %s4 = inlined_call_operand.vmem [shape: f32[1,512], index: 4, kind: output, shape index: {}]
  %s5 = sld [smem:[#allocation0]]
  $region57: #{semantic_attention.2} parent=0
    _
  %s7 = ssub.s32 1, %s5
  %s8 = scalar_select 0, %s7, %s5
  loop: start=0, step=1, limit=6
  $region2: #{semantic_attention.2} parent=0 // loop_pre_header
    _
  $region3: #{semantic_attention.2} parent=0 // loop_header
    %s10 = sphi 0, %s14
    %p11 = scmp.ge.s32.totalorder %s10, 6
    %s20 = sphi 0, %s22
    %s23 = sphi 0, %s20
    %s24 = sphi 0, %s23
    %s40 = sphi 0, %s24
    %s44 = sphi 0, %s44
    %s46 = sphi 0, %s44
    %s47 = sphi 0, %s46
    %s61 = sphi 0, %s47
    %s65 = sphi 0, %s65
    %s67 = sphi 0, %s65
    %s68 = sphi 0, %s67
    %s82 = sphi 0, %s68
    %s86 = sphi 0, %s86
    %s88 = sphi 0, %s86
    %s89 = sphi 0, %s88
    %s103 = sphi 0, %s89
    %s107 = sphi 0, %s107
    %s109 = sphi 0, %s107
    %s110 = sphi 0, %s109
    %s124 = sphi 0, %s110
  $region4: #{semantic_attention.2} parent=0 // loop_header_branch
    %13 = sbr.rel (%p11) target = $region8
  $region5: #{semantic_attention.2} parent=0 // loop_body
    %s15 = ssub.s32 %s10, 1
    %s16 = ssub.s32 %s10, 2
    %s17 = sadd.s32 %s10, 1
    %s18 = ssub.s32 %s10, %s17
    %p19 = scmp.eq.s32.totalorder %s18, 0
    %s21 = sadd.s32 %s20, 1
    %s22 = scalar_select %p19, %s20, %s21
    %p25 = pneg %p19
    %p26 = scmp.eq.s32.totalorder %s10, 3
    %p27 = por %p25, %p26
    %p28 = scmp.ne.s32.totalorder %s20, %s23
    %p29 = scmp.eq.s32.totalorder %s10, 0
    %p30 = por %p28, %p29
    %p31 = scmp.ne.s32.totalorder %s20, %s23
    %p32 = scmp.eq.s32.totalorder %s15, 3
    %p33 = por %p31, %p32
    %p34 = scmp.ne.s32.totalorder %s23, %s24
    %p35 = scmp.eq.s32.totalorder %s15, 0
    %p36 = por %p34, %p35
    %p37 = scmp.ne.s32.totalorder %s23, %s24
    %p38 = scmp.eq.s32.totalorder %s16, 3
    %p39 = por %p37, %p38
    %p41 = scmp.ne.s32.totalorder %s24, %s40
    %p42 = scmp.eq.s32.totalorder %s16, 0
    %p43 = por %p41, %p42
    %s45 = sadd.s32 %s44, 1
    %p48 = scmp.eq.s32.totalorder %s10, 3
    %p49 = scmp.ne.s32.totalorder %s44, %s46
    %p50 = scmp.eq.s32.totalorder %s10, 0
    %p51 = por %p49, %p50
    %p52 = scmp.ne.s32.totalorder %s44, %s46
    %p53 = scmp.eq.s32.totalorder %s15, 3
    %p54 = por %p52, %p53
    %p55 = scmp.ne.s32.totalorder %s46, %s47
    %p56 = scmp.eq.s32.totalorder %s15, 0
    %p57 = por %p55, %p56
    %p58 = scmp.ne.s32.totalorder %s46, %s47
    %p59 = scmp.eq.s32.totalorder %s16, 3
    %p60 = por %p58, %p59
    %p62 = scmp.ne.s32.totalorder %s47, %s61
    %p63 = scmp.eq.s32.totalorder %s16, 0
    %p64 = por %p62, %p63
    %s66 = sadd.s32 %s65, 1
    %p69 = scmp.eq.s32.totalorder %s10, 3
    %p70 = scmp.ne.s32.totalorder %s65, %s67
    %p71 = scmp.eq.s32.totalorder %s10, 0
    %p72 = por %p70, %p71
    %p73 = scmp.ne.s32.totalorder %s65, %s67
    %p74 = scmp.eq.s32.totalorder %s15, 3
    %p75 = por %p73, %p74
    %p76 = scmp.ne.s32.totalorder %s67, %s68
    %p77 = scmp.eq.s32.totalorder %s15, 0
    %p78 = por %p76, %p77
    %p79 = scmp.ne.s32.totalorder %s67, %s68
    %p80 = scmp.eq.s32.totalorder %s16, 3
    %p81 = por %p79, %p80
    %p83 = scmp.ne.s32.totalorder %s68, %s82
    %p84 = scmp.eq.s32.totalorder %s16, 0
    %p85 = por %p83, %p84
    %s87 = sadd.s32 %s86, 1
    %p90 = scmp.eq.s32.totalorder %s10, 3
    %p91 = scmp.ne.s32.totalorder %s86, %s88
    %p92 = scmp.eq.s32.totalorder %s10, 0
    %p93 = por %p91, %p92
    %p94 = scmp.ne.s32.totalorder %s86, %s88
    %p95 = scmp.eq.s32.totalorder %s15, 3
    %p96 = por %p94, %p95
    %p97 = scmp.ne.s32.totalorder %s88, %s89
    %p98 = scmp.eq.s32.totalorder %s15, 0
    %p99 = por %p97, %p98
    %p100 = scmp.ne.s32.totalorder %s88, %s89
    %p101 = scmp.eq.s32.totalorder %s16, 3
    %p102 = por %p100, %p101
    %p104 = scmp.ne.s32.totalorder %s89, %s103
    %p105 = scmp.eq.s32.totalorder %s16, 0
    %p106 = por %p104, %p105
    %s108 = sadd.s32 %s107, 1
    %p111 = scmp.eq.s32.totalorder %s10, 3
    %p112 = scmp.ne.s32.totalorder %s107, %s109
    %p113 = scmp.eq.s32.totalorder %s10, 0
    %p114 = por %p112, %p113
    %p115 = scmp.ne.s32.totalorder %s107, %s109
    %p116 = scmp.eq.s32.totalorder %s15, 3
    %p117 = por %p115, %p116
    %p118 = scmp.ne.s32.totalorder %s109, %s110
    %p119 = scmp.eq.s32.totalorder %s15, 0
    %p120 = por %p118, %p119
    %p121 = scmp.ne.s32.totalorder %s109, %s110
    %p122 = scmp.eq.s32.totalorder %s16, 3
    %p123 = por %p121, %p122
    %p125 = scmp.ne.s32.totalorder %s110, %s124
    %p126 = scmp.eq.s32.totalorder %s16, 0
    %p127 = por %p125, %p126
    %p128 = scmp.le.s32.totalorder 1, %s10
    %p129 = scmp.lt.s32.totalorder %s10, 5
    %p130 = pnand %p128, %p129
    %p131 = pneg %p130
    // Predicated region
    $region9: #{semantic_attention.2} parent=5 // pred_check
      _
    $region10: #{semantic_attention.2} parent=5 // pred_check_branch
      %133 = sbr.rel (%p130) target = $region12
    $region11: #{semantic_attention.2} parent=5 // pred_region
      %s134 = ssub.s32 %s10, 1
      // Predicated region
      $region13: #{semantic_attention.2} parent=11 // pred_check
        %p135 = pneg %p57
      $region14: #{semantic_attention.2} parent=11 // pred_check_branch
        %137 = sbr.rel (%p135) target = $region16
      $region15: #{semantic_attention.2} parent=11 // pred_region
        _
      $region16: #{semantic_attention.2} parent=11 // pred_fallthru
        _
      // Predicated region
      $region17: #{semantic_attention.2} parent=11 // pred_check
        %p138 = pneg %p78
      $region18: #{semantic_attention.2} parent=11 // pred_check_branch
        %140 = sbr.rel (%p138) target = $region20
      $region19: #{semantic_attention.2} parent=11 // pred_region
        _
      $region20: #{semantic_attention.2} parent=11 // pred_fallthru
        _
      // Predicated region
      $region21: #{semantic_attention.2} parent=11 // pred_check
        %p141 = pneg %p99
      $region22: #{semantic_attention.2} parent=11 // pred_check_branch
        %143 = sbr.rel (%p141) target = $region24
      $region23: #{semantic_attention.2} parent=11 // pred_region
        _
      $region24: #{semantic_attention.2} parent=11 // pred_fallthru
        _
    $region12: #{semantic_attention.2} parent=5 // pred_fallthru
      _
    %p144 = scmp.lt.s32.totalorder %s10, 4
    // Predicated region
    $region25: #{semantic_attention.2} parent=5 // pred_check
      %p145 = pneg %p144
    $region26: #{semantic_attention.2} parent=5 // pred_check_branch
      %147 = sbr.rel (%p145) target = $region28
    $region27: #{semantic_attention.2} parent=5 // pred_region
      // Predicated region
      $region29: #{semantic_attention.2} parent=27 // pred_check
        %p148 = pneg %p30
      $region30: #{semantic_attention.2} parent=27 // pred_check_branch
        %150 = sbr.rel (%p148) target = $region32
      $region31: #{semantic_attention.2} parent=27 // pred_region
        %s151 = smul.u32 16, %s10
        %p152 = scmp.lt.s32.totalorder %s151, 63
        %s153 = scalar_select %p152, %s151, 63
        %s154 = smul.addr %s153, 4
        %s155 = smul.addr %s154, 8
        %s156 = scalar_lea.vmem %s0, %s155
        %s157 = smul.u32 16, %s10
      $region32: #{semantic_attention.2} parent=27 // pred_fallthru
        _
    $region28: #{semantic_attention.2} parent=5 // pred_fallthru
      _
    %p158 = scmp.le.s32.totalorder 1, %s10
    %p159 = scmp.lt.s32.totalorder %s10, 5
    %p160 = pnand %p158, %p159
    %p161 = pneg %p160
    // Predicated region
    $region33: #{semantic_attention.2} parent=5 // pred_check
      _
    $region34: #{semantic_attention.2} parent=5 // pred_check_branch
      %163 = sbr.rel (%p160) target = $region36
    $region35: #{semantic_attention.2} parent=5 // pred_region
      %s164 = ssub.s32 %s10, 1
      %s165 = smul.u32 16, %s15
      %p166 = scmp.lt.s32.totalorder %s165, 63
      %s167 = scalar_select %p166, %s165, 63
      %s168 = smul.addr %s167, 4
      %s169 = smul.addr %s168, 8
      %s170 = scalar_lea.vmem %s0, %s169
      %p171 = pneg %p36
      %p172 = pneg %p33
      %p173 = pneg %p57
      %p174 = pneg %p54
      %p175 = pneg %p78
      %p176 = pneg %p75
      %p177 = pneg %p99
      %p178 = pneg %p96
      %p179 = pneg %p120
      %p180 = pneg %p117
      %s181 = smul.u32 16, %s15
      %p182 = scmp.lt.s32.totalorder %s181, 63
      %s183 = scalar_select %p182, %s181, 63
      %s184 = smul.addr %s183, 4
      %s185 = smul.addr %s184, 8
      %s186 = scalar_lea.vmem %s0, %s185
      %s187 = smul.u32 16, %s15
      %p188 = scmp.eq.s32.totalorder %s15, 0
      // Predicated region
      $region37: #{semantic_attention.2} parent=35 // pred_check
        %p189 = pneg %p188
      $region38: #{semantic_attention.2} parent=35 // pred_check_branch
        %191 = sbr.rel (%p189) target = $region40
      $region39: #{semantic_attention.2} parent=35 // pred_region
        %v192 = vlaneseq
        %vm193 = vcmp.ge.s32.totalorder %v192, 0
        %vm194 = vcmp.lt.s32.totalorder %v192, 512
        %vm195 = vmand %vm193, %vm194
        %196 = vst.msk [vmem:[#allocation2] sm:$0xf] %vm195, 0.0
      $region40: #{semantic_attention.2} parent=35 // pred_fallthru
        _
      %v197 = vld [vmem:[%s2] sm:$0x1]
      %v198 = vld [vmem:[%s3] sm:$0x1]
      %v199 = vld [vmem:[%s186] sm:$0xff]
      %v200 = vld [vmem:[%s186 + $0x20] sm:$0xff]
      %v201 = vld [vmem:[%s186 + $0x40] sm:$0xff]
      %v202 = vld [vmem:[%s186 + $0x60] sm:$0xff]
      %v203 = vld [vmem:[%s186 + $0x80] sm:$0xff]
      %v204 = vld [vmem:[%s186 + $0xa0] sm:$0xff]
      %v205 = vld [vmem:[%s186 + $0xc0] sm:$0xff]
      %v206 = vld [vmem:[%s186 + $0xe0] sm:$0xff]
      %v207 = vld [vmem:[%s186 + $0x100] sm:$0xff]
      %v208 = vld [vmem:[%s186 + $0x120] sm:$0xff]
      %v209 = vld [vmem:[%s186 + $0x140] sm:$0xff]
      %v210 = vld [vmem:[%s186 + $0x160] sm:$0xff]
      %v211 = vld [vmem:[%s186 + $0x180] sm:$0xff]
      %v212 = vld [vmem:[%s186 + $0x1a0] sm:$0xff]
      %v213 = vld [vmem:[%s186 + $0x1c0] sm:$0xff]
      %v214 = vld [vmem:[%s186 + $0x1e0] sm:$0xff]
      %v215 = vld [vmem:[%s1] sm:$0xff]
      %v216 = vld [vmem:[%s1 + $0x8] sm:$0xff]
      %v217 = vld [vmem:[%s1 + $0x10] sm:$0xff]
      %v218 = vld [vmem:[%s1 + $0x18] sm:$0xff]
      %v219 = vld [vmem:[%s1 + $0x20] sm:$0xff]
      %v220 = vld [vmem:[%s1 + $0x28] sm:$0xff]
      %v221 = vld [vmem:[%s1 + $0x30] sm:$0xff]
      %v222 = vld [vmem:[%s1 + $0x38] sm:$0xff]
      %v223 = vld [vmem:[%s1 + $0x40] sm:$0xff]
      %v224 = vld [vmem:[%s1 + $0x48] sm:$0xff]
      %v225 = vld [vmem:[%s1 + $0x50] sm:$0xff]
      %v226 = vld [vmem:[%s1 + $0x58] sm:$0xff]
      %v227 = vld [vmem:[%s1 + $0x60] sm:$0xff]
      %v228 = vld [vmem:[%s1 + $0x68] sm:$0xff]
      %v229 = vld [vmem:[%s1 + $0x70] sm:$0xff]
      %v230 = vld [vmem:[%s1 + $0x78] sm:$0xff]
      %v232 = vlaneseq
      %v233 = vshrl.u32 %v232, 7
      %v234 = vsub.s32 0, %v233
      %v235 = vrot.slane %v197, %v234
      %237 = vmatprep.subr.mxu0 0.0
      %238 = vmatpush1.msra.mxu0 %v215
      %239 = vmatprep.subr.mxu0 0.0
      %240 = vmatpush1.msra.mxu0 %v216
      %241 = vmatprep.subr.mxu0 0.0
      %242 = vmatpush1.msra.mxu0 %v217
      %243 = vmatprep.subr.mxu0 0.0
      %244 = vmatpush1.msra.mxu0 %v218
      %245 = vmatprep.subr.mxu0 0.0
      %246 = vmatpush1.msra.mxu0 %v219
      %247 = vmatprep.subr.mxu0 0.0
      %248 = vmatpush1.msra.mxu0 %v220
      %249 = vmatprep.subr.mxu0 0.0
      %250 = vmatpush1.msra.mxu0 %v221
      %251 = vmatprep.subr.mxu0 0.0
      %252 = vmatpush1.msra.mxu0 %v222
      %253 = vmatprep.subr.mxu0 0.0
      %254 = vmatpush1.msra.mxu0 %v223
      %255 = vmatprep.subr.mxu0 0.0
      %256 = vmatpush1.msra.mxu0 %v224
      %257 = vmatprep.subr.mxu0 0.0
      %258 = vmatpush1.msra.mxu0 %v225
      %259 = vmatprep.subr.mxu0 0.0
      %260 = vmatpush1.msra.mxu0 %v226
      %261 = vmatprep.subr.mxu0 0.0
      %262 = vmatpush1.msra.mxu0 %v227
      %263 = vmatprep.subr.mxu0 0.0
      %264 = vmatpush1.msra.mxu0 %v228
      %265 = vmatprep.subr.mxu0 0.0
      %266 = vmatpush1.msra.mxu0 %v229
      %267 = vmatprep.subr.mxu0 0.0
      %268 = vmatpush1.msra.mxu0 %v230
      %269 = vmatprep.subr.mxu0 0.0
      %270 = vmatpush1.msra.mxu0 0.0
      %271 = vmatprep.subr.mxu0 0.0
      %272 = vmatpush1.msra.mxu0 0.0
      %273 = vmatprep.subr.mxu0 0.0
      %274 = vmatpush1.msra.mxu0 0.0
      %275 = vmatprep.subr.mxu0 0.0
      %276 = vmatpush1.msra.mxu0 0.0
      %277 = vmatprep.subr.mxu0 0.0
      %278 = vmatpush1.msra.mxu0 0.0
      %279 = vmatprep.subr.mxu0 0.0
      %280 = vmatpush1.msra.mxu0 0.0
      %281 = vmatprep.subr.mxu0 0.0
      %282 = vmatpush1.msra.mxu0 0.0
      %283 = vmatprep.subr.mxu0 0.0
      %284 = vmatpush1.msra.mxu0 0.0
      %285 = vmatprep.subr.mxu0 0.0
      %286 = vmatpush1.msra.mxu0 0.0
      %287 = vmatprep.subr.mxu0 0.0
      %288 = vmatpush1.msra.mxu0 0.0
      %289 = vmatprep.subr.mxu0 0.0
      %290 = vmatpush1.msra.mxu0 0.0
      %291 = vmatprep.subr.mxu0 0.0
      %292 = vmatpush1.msra.mxu0 0.0
      %293 = vmatprep.subr.mxu0 0.0
      %294 = vmatpush1.msra.mxu0 0.0
      %295 = vmatprep.subr.mxu0 0.0
      %296 = vmatpush1.msra.mxu0 0.0
      %297 = vmatprep.subr.mxu0 0.0
      %298 = vmatpush1.msra.mxu0 0.0
      %299 = vmatprep.subr.mxu0 0.0
      %300 = vmatpush1.msra.mxu0 0.0
      %301 = vmatprep.mubr.f32.mxu0 0.0
      %302 = vmatmul.mubr.f32.gmra.mrb[0].mxu0 %v199
      %v303 = vpop.f32.mrb[0].mxu0
      %v304 = vadd.f32 %v235, %v303
      %v305 = vpop.f32.mrb[0].mxu0
      %306 = vmatprep.mubr.f32.mxu0 0.0
      %307 = vmatmul.mubr.f32.gmra.mrb[0].mxu0 %v200
      %v308 = vpop.f32.mrb[0].mxu0
      %v309 = vadd.f32 %v235, %v308
      %v310 = vpop.f32.mrb[0].mxu0
      %311 = vmatprep.mubr.f32.mxu0 0.0
      %312 = vmatmul.mubr.f32.gmra.mrb[0].mxu0 %v201
      %v313 = vpop.f32.mrb[0].mxu0
      %v314 = vadd.f32 %v235, %v313
      %v315 = vpop.f32.mrb[0].mxu0
      %316 = vmatprep.mubr.f32.mxu0 0.0
      %317 = vmatmul.mubr.f32.gmra.mrb[0].mxu0 %v202
      %v318 = vpop.f32.mrb[0].mxu0
      %v319 = vadd.f32 %v235, %v318
      %v320 = vpop.f32.mrb[0].mxu0
      %321 = vmatprep.mubr.f32.mxu0 0.0
      %322 = vmatmul.mubr.f32.gmra.mrb[0].mxu0 %v203
      %v323 = vpop.f32.mrb[0].mxu0
      %v324 = vadd.f32 %v235, %v323
      %v325 = vpop.f32.mrb[0].mxu0
      %326 = vmatprep.mubr.f32.mxu0 0.0
      %327 = vmatmul.mubr.f32.gmra.mrb[0].mxu0 %v204
      %v328 = vpop.f32.mrb[0].mxu0
      %v329 = vadd.f32 %v235, %v328
      %v330 = vpop.f32.mrb[0].mxu0
      %331 = vmatprep.mubr.f32.mxu0 0.0
      %332 = vmatmul.mubr.f32.gmra.mrb[0].mxu0 %v205
      %v333 = vpop.f32.mrb[0].mxu0
      %v334 = vadd.f32 %v235, %v333
      %v335 = vpop.f32.mrb[0].mxu0
      %336 = vmatprep.mubr.f32.mxu0 0.0
      %337 = vmatmul.mubr.f32.gmra.mrb[0].mxu0 %v206
      %v338 = vpop.f32.mrb[0].mxu0
      %v339 = vadd.f32 %v235, %v338
      %v340 = vpop.f32.mrb[0].mxu0
      %341 = vmatprep.mubr.f32.mxu0 0.0
      %342 = vmatmul.mubr.f32.gmra.mrb[0].mxu0 %v207
      %v343 = vpop.f32.mrb[0].mxu0
      %v344 = vadd.f32 %v235, %v343
      %v345 = vpop.f32.mrb[0].mxu0
      %346 = vmatprep.mubr.f32.mxu0 0.0
      %347 = vmatmul.mubr.f32.gmra.mrb[0].mxu0 %v208
      %v348 = vpop.f32.mrb[0].mxu0
      %v349 = vadd.f32 %v235, %v348
      %v350 = vpop.f32.mrb[0].mxu0
      %351 = vmatprep.mubr.f32.mxu0 0.0
      %352 = vmatmul.mubr.f32.gmra.mrb[0].mxu0 %v209
      %v353 = vpop.f32.mrb[0].mxu0
      %v354 = vadd.f32 %v235, %v353
      %v355 = vpop.f32.mrb[0].mxu0
      %356 = vmatprep.mubr.f32.mxu0 0.0
      %357 = vmatmul.mubr.f32.gmra.mrb[0].mxu0 %v210
      %v358 = vpop.f32.mrb[0].mxu0
      %v359 = vadd.f32 %v235, %v358
      %v360 = vpop.f32.mrb[0].mxu0
      %361 = vmatprep.mubr.f32.mxu0 0.0
      %362 = vmatmul.mubr.f32.gmra.mrb[0].mxu0 %v211
      %v363 = vpop.f32.mrb[0].mxu0
      %v364 = vadd.f32 %v235, %v363
      %v365 = vpop.f32.mrb[0].mxu0
      %366 = vmatprep.mubr.f32.mxu0 0.0
      %367 = vmatmul.mubr.f32.gmra.mrb[0].mxu0 %v212
      %v368 = vpop.f32.mrb[0].mxu0
      %v369 = vadd.f32 %v235, %v368
      %v370 = vpop.f32.mrb[0].mxu0
      %371 = vmatprep.mubr.f32.mxu0 0.0
      %372 = vmatmul.mubr.f32.gmra.mrb[0].mxu0 %v213
      %v373 = vpop.f32.mrb[0].mxu0
      %v374 = vadd.f32 %v235, %v373
      %v375 = vpop.f32.mrb[0].mxu0
      %376 = vmatprep.mubr.f32.mxu0 0.0
      %377 = vmatmul.mubr.f32.gmra.mrb[0].mxu0 %v214
      %v378 = vpop.f32.mrb[0].mxu0
      %v379 = vadd.f32 %v235, %v378
      %v380 = vpop.f32.mrb[0].mxu0
      %381 = vdwg.mxu0
      %v382 = vtanh.pop %v304
      %v383 = vtanh.pop %v309
      %v384 = vtanh.pop %v314
      %v385 = vtanh.pop %v319
      %v386 = vtanh.pop %v324
      %v387 = vtanh.pop %v329
      %v388 = vtanh.pop %v334
      %v389 = vtanh.pop %v339
      %v390 = vtanh.pop %v344
      %v391 = vtanh.pop %v349
      %v392 = vtanh.pop %v354
      %v393 = vtanh.pop %v359
      %v394 = vtanh.pop %v364
      %v395 = vtanh.pop %v369
      %v396 = vtanh.pop %v374
      %v397 = vtanh.pop %v379
      %v399 = vlaneseq
      %v400 = vshrl.u32 %v399, 7
      %v401 = vsub.s32 0, %v400
      %v402 = vrot.slane %v198, %v401
      %v404 = vmul.f32 %v382, %v402
      %v405 = vmul.f32 %v383, %v402
      %v406 = vmul.f32 %v384, %v402
      %v407 = vmul.f32 %v385, %v402
      %v408 = vmul.f32 %v386, %v402
      %v409 = vmul.f32 %v387, %v402
      %v410 = vmul.f32 %v388, %v402
      %v411 = vmul.f32 %v389, %v402
      %v412 = vmul.f32 %v390, %v402
      %v413 = vmul.f32 %v391, %v402
      %v414 = vmul.f32 %v392, %v402
      %v415 = vmul.f32 %v393, %v402
      %v416 = vmul.f32 %v394, %v402
      %v417 = vmul.f32 %v395, %v402
      %v418 = vmul.f32 %v396, %v402
      %v419 = vmul.f32 %v397, %v402
      %v420 = vld [vmem:[#allocation2] sm:$0x1]
      %v421 = vadd.f32 %v404, %v405
      %v422 = vadd.f32 %v421, %v406
      %v423 = vadd.f32 %v422, %v407
      %v424 = vadd.f32 %v423, %v408
      %v425 = vadd.f32 %v424, %v409
      %v426 = vadd.f32 %v425, %v410
      %v427 = vadd.f32 %v426, %v411
      %v428 = vadd.f32 %v427, %v412
      %v429 = vadd.f32 %v428, %v413
      %v430 = vadd.f32 %v429, %v414
      %v431 = vadd.f32 %v430, %v415
      %v432 = vadd.f32 %v431, %v416
      %v433 = vadd.f32 %v432, %v417
      %v434 = vadd.f32 %v433, %v418
      %v435 = vadd.f32 %v434, %v419
      %v436 = vrot.slane %v435, 4
      %v437 = vadd.f32 %v435, %v436
      %v438 = vrot.slane %v437, 2
      %v439 = vadd.f32 %v437, %v438
      %v440 = vrot.slane %v439, 1
      %v441 = vadd.f32 %v439, %v440
      %v442 = vadd.f32 %v420, %v441
      %v443 = vlaneseq
      %vm444 = vcmp.ge.s32.totalorder %v443, 0
      %vm445 = vcmp.lt.s32.totalorder %v443, 128
      %vm446 = vmand %vm444, %vm445
      %447 = vst.msk [vmem:[#allocation2] sm:$0x1] %vm446, %v442
      %v448 = vld [vmem:[%s186 + $0x8] sm:$0xff]
      %v449 = vld [vmem:[%s186 + $0x28] sm:$0xff]
      %v450 = vld [vmem:[%s186 + $0x48] sm:$0xff]
      %v451 = vld [vmem:[%s186 + $0x68] sm:$0xff]
      %v452 = vld [vmem:[%s186 + $0x88] sm:$0xff]
      %v453 = vld [vmem:[%s186 + $0xa8] sm:$0xff]
      %v454 = vld [vmem:[%s186 + $0xc8] sm:$0xff]
      %v455 = vld [vmem:[%s186 + $0xe8] sm:$0xff]
      %v456 = vld [vmem:[%s186 + $0x108] sm:$0xff]
      %v457 = vld [vmem:[%s186 + $0x128] sm:$0xff]
      %v458 = vld [vmem:[%s186 + $0x148] sm:$0xff]
      %v459 = vld [vmem:[%s186 + $0x168] sm:$0xff]
      %v460 = vld [vmem:[%s186 + $0x188] sm:$0xff]
      %v461 = vld [vmem:[%s186 + $0x1a8] sm:$0xff]
      %v462 = vld [vmem:[%s186 + $0x1c8] sm:$0xff]
      %v463 = vld [vmem:[%s186 + $0x1e8] sm:$0xff]
      %v464 = vld [vmem:[%s1] sm:$0xff]
      %v465 = vld [vmem:[%s1 + $0x8] sm:$0xff]
      %v466 = vld [vmem:[%s1 + $0x10] sm:$0xff]
      %v467 = vld [vmem:[%s1 + $0x18] sm:$0xff]
      %v468 = vld [vmem:[%s1 + $0x20] sm:$0xff]
      %v469 = vld [vmem:[%s1 + $0x28] sm:$0xff]
      %v470 = vld [vmem:[%s1 + $0x30] sm:$0xff]
      %v471 = vld [vmem:[%s1 + $0x38] sm:$0xff]
      %v472 = vld [vmem:[%s1 + $0x40] sm:$0xff]
      %v473 = vld [vmem:[%s1 + $0x48] sm:$0xff]
      %v474 = vld [vmem:[%s1 + $0x50] sm:$0xff]
      %v475 = vld [vmem:[%s1 + $0x58] sm:$0xff]
      %v476 = vld [vmem:[%s1 + $0x60] sm:$0xff]
      %v477 = vld [vmem:[%s1 + $0x68] sm:$0xff]
      %v478 = vld [vmem:[%s1 + $0x70] sm:$0xff]
      %v479 = vld [vmem:[%s1 + $0x78] sm:$0xff]
      %480 = vmatprep.subr.mxu0 0.0
      %481 = vmatpush1.msra.mxu0 %v464
      %482 = vmatprep.subr.mxu0 0.0
      %483 = vmatpush1.msra.mxu0 %v465
      %484 = vmatprep.subr.mxu0 0.0
      %485 = vmatpush1.msra.mxu0 %v466
      %486 = vmatprep.subr.mxu0 0.0
      %487 = vmatpush1.msra.mxu0 %v467
      %488 = vmatprep.subr.mxu0 0.0
      %489 = vmatpush1.msra.mxu0 %v468
      %490 = vmatprep.subr.mxu0 0.0
      %491 = vmatpush1.msra.mxu0 %v469
      %492 = vmatprep.subr.mxu0 0.0
      %493 = vmatpush1.msra.mxu0 %v470
      %494 = vmatprep.subr.mxu0 0.0
      %495 = vmatpush1.msra.mxu0 %v471
      %496 = vmatprep.subr.mxu0 0.0
      %497 = vmatpush1.msra.mxu0 %v472
      %498 = vmatprep.subr.mxu0 0.0
      %499 = vmatpush1.msra.mxu0 %v473
      %500 = vmatprep.subr.mxu0 0.0
      %501 = vmatpush1.msra.mxu0 %v474
      %502 = vmatprep.subr.mxu0 0.0
      %503 = vmatpush1.msra.mxu0 %v475
      %504 = vmatprep.subr.mxu0 0.0
      %505 = vmatpush1.msra.mxu0 %v476
      %506 = vmatprep.subr.mxu0 0.0
      %507 = vmatpush1.msra.mxu0 %v477
      %508 = vmatprep.subr.mxu0 0.0
      %509 = vmatpush1.msra.mxu0 %v478
      %510 = vmatprep.subr.mxu0 0.0
      %511 = vmatpush1.msra.mxu0 %v479
      %512 = vmatprep.subr.mxu0 0.0
      %513 = vmatpush1.msra.mxu0 0.0
      %514 = vmatprep.subr.mxu0 0.0
      %515 = vmatpush1.msra.mxu0 0.0
      %516 = vmatprep.subr.mxu0 0.0
      %517 = vmatpush1.msra.mxu0 0.0
      %518 = vmatprep.subr.mxu0 0.0
      %519 = vmatpush1.msra.mxu0 0.0
      %520 = vmatprep.subr.mxu0 0.0
      %521 = vmatpush1.msra.mxu0 0.0
      %522 = vmatprep.subr.mxu0 0.0
      %523 = vmatpush1.msra.mxu0 0.0
      %524 = vmatprep.subr.mxu0 0.0
      %525 = vmatpush1.msra.mxu0 0.0
      %526 = vmatprep.subr.mxu0 0.0
      %527 = vmatpush1.msra.mxu0 0.0
      %528 = vmatprep.subr.mxu0 0.0
      %529 = vmatpush1.msra.mxu0 0.0
      %530 = vmatprep.subr.mxu0 0.0
      %531 = vmatpush1.msra.mxu0 0.0
      %532 = vmatprep.subr.mxu0 0.0
      %533 = vmatpush1.msra.mxu0 0.0
      %534 = vmatprep.subr.mxu0 0.0
      %535 = vmatpush1.msra.mxu0 0.0
      %536 = vmatprep.subr.mxu0 0.0
      %537 = vmatpush1.msra.mxu0 0.0
      %538 = vmatprep.subr.mxu0 0.0
      %539 = vmatpush1.msra.mxu0 0.0
      %540 = vmatprep.subr.mxu0 0.0
      %541 = vmatpush1.msra.mxu0 0.0
      %542 = vmatprep.subr.mxu0 0.0
      %543 = vmatpush1.msra.mxu0 0.0
      %544 = vmatprep.mubr.f32.mxu0 0.0
      %545 = vmatmul.mubr.f32.gmra.mrb[0].mxu0 %v448
      %v546 = vpop.f32.mrb[0].mxu0
      %v547 = vadd.f32 %v235, %v546
      %v548 = vpop.f32.mrb[0].mxu0
      %549 = vmatprep.mubr.f32.mxu0 0.0
      %550 = vmatmul.mubr.f32.gmra.mrb[0].mxu0 %v449
      %v551 = vpop.f32.mrb[0].mxu0
      %v552 = vadd.f32 %v235, %v551
      %v553 = vpop.f32.mrb[0].mxu0
      %554 = vmatprep.mubr.f32.mxu0 0.0
      %555 = vmatmul.mubr.f32.gmra.mrb[0].mxu0 %v450
      %v556 = vpop.f32.mrb[0].mxu0
      %v557 = vadd.f32 %v235, %v556
      %v558 = vpop.f32.mrb[0].mxu0
      %559 = vmatprep.mubr.f32.mxu0 0.0
      %560 = vmatmul.mubr.f32.gmra.mrb[0].mxu0 %v451
      %v561 = vpop.f32.mrb[0].mxu0
      %v562 = vadd.f32 %v235, %v561
      %v563 = vpop.f32.mrb[0].mxu0
      %564 = vmatprep.mubr.f32.mxu0 0.0
      %565 = vmatmul.mubr.f32.gmra.mrb[0].mxu0 %v452
      %v566 = vpop.f32.mrb[0].mxu0
      %v567 = vadd.f32 %v235, %v566
      %v568 = vpop.f32.mrb[0].mxu0
      %569 = vmatprep.mubr.f32.mxu0 0.0
      %570 = vmatmul.mubr.f32.gmra.mrb[0].mxu0 %v453
      %v571 = vpop.f32.mrb[0].mxu0
      %v572 = vadd.f32 %v235, %v571
      %v573 = vpop.f32.mrb[0].mxu0
      %574 = vmatprep.mubr.f32.mxu0 0.0
      %575 = vmatmul.mubr.f32.gmra.mrb[0].mxu0 %v454
      %v576 = vpop.f32.mrb[0].mxu0
      %v577 = vadd.f32 %v235, %v576
      %v578 = vpop.f32.mrb[0].mxu0
      %579 = vmatprep.mubr.f32.mxu0 0.0
      %580 = vmatmul.mubr.f32.gmra.mrb[0].mxu0 %v455
      %v581 = vpop.f32.mrb[0].mxu0
      %v582 = vadd.f32 %v235, %v581
      %v583 = vpop.f32.mrb[0].mxu0
      %584 = vmatprep.mubr.f32.mxu0 0.0
      %585 = vmatmul.mubr.f32.gmra.mrb[0].mxu0 %v456
      %v586 = vpop.f32.mrb[0].mxu0
      %v587 = vadd.f32 %v235, %v586
      %v588 = vpop.f32.mrb[0].mxu0
      %589 = vmatprep.mubr.f32.mxu0 0.0
      %590 = vmatmul.mubr.f32.gmra.mrb[0].mxu0 %v457
      %v591 = vpop.f32.mrb[0].mxu0
      %v592 = vadd.f32 %v235, %v591
      %v593 = vpop.f32.mrb[0].mxu0
      %594 = vmatprep.mubr.f32.mxu0 0.0
      %595 = vmatmul.mubr.f32.gmra.mrb[0].mxu0 %v458
      %v596 = vpop.f32.mrb[0].mxu0
      %v597 = vadd.f32 %v235, %v596
      %v598 = vpop.f32.mrb[0].mxu0
      %599 = vmatprep.mubr.f32.mxu0 0.0
      %600 = vmatmul.mubr.f32.gmra.mrb[0].mxu0 %v459
      %v601 = vpop.f32.mrb[0].mxu0
      %v602 = vadd.f32 %v235, %v601
      %v603 = vpop.f32.mrb[0].mxu0
      %604 = vmatprep.mubr.f32.mxu0 0.0
      %605 = vmatmul.mubr.f32.gmra.mrb[0].mxu0 %v460
      %v606 = vpop.f32.mrb[0].mxu0
      %v607 = vadd.f32 %v235, %v606
      %v608 = vpop.f32.mrb[0].mxu0
      %609 = vmatprep.mubr.f32.mxu0 0.0
      %610 = vmatmul.mubr.f32.gmra.mrb[0].mxu0 %v461
      %v611 = vpop.f32.mrb[0].mxu0
      %v612 = vadd.f32 %v235, %v611
      %v613 = vpop.f32.mrb[0].mxu0
      %614 = vmatprep.mubr.f32.mxu0 0.0
      %615 = vmatmul.mubr.f32.gmra.mrb[0].mxu0 %v462
      %v616 = vpop.f32.mrb[0].mxu0
      %v617 = vadd.f32 %v235, %v616
      %v618 = vpop.f32.mrb[0].mxu0
      %619 = vmatprep.mubr.f32.mxu0 0.0
      %620 = vmatmul.mubr.f32.gmra.mrb[0].mxu0 %v463
      %v621 = vpop.f32.mrb[0].mxu0
      %v622 = vadd.f32 %v235, %v621
      %v623 = vpop.f32.mrb[0].mxu0
      %624 = vdwg.mxu0
      %v625 = vtanh.pop %v547
      %v626 = vtanh.pop %v552
      %v627 = vtanh.pop %v557
      %v628 = vtanh.pop %v562
      %v629 = vtanh.pop %v567
      %v630 = vtanh.pop %v572
      %v631 = vtanh.pop %v577
      %v632 = vtanh.pop %v582
      %v633 = vtanh.pop %v587
      %v634 = vtanh.pop %v592
      %v635 = vtanh.pop %v597
      %v636 = vtanh.pop %v602
      %v637 = vtanh.pop %v607
      %v638 = vtanh.pop %v612
      %v639 = vtanh.pop %v617
      %v640 = vtanh.pop %v622
      %v641 = vmul.f32 %v625, %v402
      %v642 = vmul.f32 %v626, %v402
      %v643 = vmul.f32 %v627, %v402
      %v644 = vmul.f32 %v628, %v402
      %v645 = vmul.f32 %v629, %v402
      %v646 = vmul.f32 %v630, %v402
      %v647 = vmul.f32 %v631, %v402
      %v648 = vmul.f32 %v632, %v402
      %v649 = vmul.f32 %v633, %v402
      %v650 = vmul.f32 %v634, %v402
      %v651 = vmul.f32 %v635, %v402
      %v652 = vmul.f32 %v636, %v402
      %v653 = vmul.f32 %v637, %v402
      %v654 = vmul.f32 %v638, %v402
      %v655 = vmul.f32 %v639, %v402
      %v656 = vmul.f32 %v640, %v402
      %v657 = vld [vmem:[#allocation2 + $0x1] sm:$0x1]
      %v658 = vadd.f32 %v641, %v642
      %v659 = vadd.f32 %v658, %v643
      %v660 = vadd.f32 %v659, %v644
      %v661 = vadd.f32 %v660, %v645
      %v662 = vadd.f32 %v661, %v646
      %v663 = vadd.f32 %v662, %v647
      %v664 = vadd.f32 %v663, %v648
      %v665 = vadd.f32 %v664, %v649
      %v666 = vadd.f32 %v665, %v650
      %v667 = vadd.f32 %v666, %v651
      %v668 = vadd.f32 %v667, %v652
      %v669 = vadd.f32 %v668, %v653
      %v670 = vadd.f32 %v669, %v654
      %v671 = vadd.f32 %v670, %v655
      %v672 = vadd.f32 %v671, %v656
      %v673 = vrot.slane %v672, 4
      %v674 = vadd.f32 %v672, %v673
      %v675 = vrot.slane %v674, 2
      %v676 = vadd.f32 %v674, %v675
      %v677 = vrot.slane %v676, 1
      %v678 = vadd.f32 %v676, %v677
      %v679 = vadd.f32 %v657, %v678
      %680 = vst.msk [vmem:[#allocation2 + $0x1] sm:$0x1] %vm446, %v679
      %v681 = vld [vmem:[%s186 + $0x10] sm:$0xff]
      %v682 = vld [vmem:[%s186 + $0x30] sm:$0xff]
      %v683 = vld [vmem:[%s186 + $0x50] sm:$0xff]
      %v684 = vld [vmem:[%s186 + $0x70] sm:$0xff]
      %v685 = vld [vmem:[%s186 + $0x90] sm:$0xff]
      %v686 = vld [vmem:[%s186 + $0xb0] sm:$0xff]
      %v687 = vld [vmem:[%s186 + $0xd0] sm:$0xff]
      %v688 = vld [vmem:[%s186 + $0xf0] sm:$0xff]
      %v689 = vld [vmem:[%s186 + $0x110] sm:$0xff]
      %v690 = vld [vmem:[%s186 + $0x130] sm:$0xff]
      %v691 = vld [vmem:[%s186 + $0x150] sm:$0xff]
      %v692 = vld [vmem:[%s186 + $0x170] sm:$0xff]
      %v693 = vld [vmem:[%s186 + $0x190] sm:$0xff]
      %v694 = vld [vmem:[%s186 + $0x1b0] sm:$0xff]
      %v695 = vld [vmem:[%s186 + $0x1d0] sm:$0xff]
      %v696 = vld [vmem:[%s186 + $0x1f0] sm:$0xff]
      %v697 = vld [vmem:[%s1] sm:$0xff]
      %v698 = vld [vmem:[%s1 + $0x8] sm:$0xff]
      %v699 = vld [vmem:[%s1 + $0x10] sm:$0xff]
      %v700 = vld [vmem:[%s1 + $0x18] sm:$0xff]
      %v701 = vld [vmem:[%s1 + $0x20] sm:$0xff]
      %v702 = vld [vmem:[%s1 + $0x28] sm:$0xff]
      %v703 = vld [vmem:[%s1 + $0x30] sm:$0xff]
      %v704 = vld [vmem:[%s1 + $0x38] sm:$0xff]
      %v705 = vld [vmem:[%s1 + $0x40] sm:$0xff]
      %v706 = vld [vmem:[%s1 + $0x48] sm:$0xff]
      %v707 = vld [vmem:[%s1 + $0x50] sm:$0xff]
      %v708 = vld [vmem:[%s1 + $0x58] sm:$0xff]
      %v709 = vld [vmem:[%s1 + $0x60] sm:$0xff]
      %v710 = vld [vmem:[%s1 + $0x68] sm:$0xff]
      %v711 = vld [vmem:[%s1 + $0x70] sm:$0xff]
      %v712 = vld [vmem:[%s1 + $0x78] sm:$0xff]
      %713 = vmatprep.subr.mxu0 0.0
      %714 = vmatpush1.msra.mxu0 %v697
      %715 = vmatprep.subr.mxu0 0.0
      %716 = vmatpush1.msra.mxu0 %v698
      %717 = vmatprep.subr.mxu0 0.0
      %718 = vmatpush1.msra.mxu0 %v699
      %719 = vmatprep.subr.mxu0 0.0
      %720 = vmatpush1.msra.mxu0 %v700
      %721 = vmatprep.subr.mxu0 0.0
      %722 = vmatpush1.msra.mxu0 %v701
      %723 = vmatprep.subr.mxu0 0.0
      %724 = vmatpush1.msra.mxu0 %v702
      %725 = vmatprep.subr.mxu0 0.0
      %726 = vmatpush1.msra.mxu0 %v703
      %727 = vmatprep.subr.mxu0 0.0
      %728 = vmatpush1.msra.mxu0 %v704
      %729 = vmatprep.subr.mxu0 0.0
      %730 = vmatpush1.msra.mxu0 %v705
      %731 = vmatprep.subr.mxu0 0.0
      %732 = vmatpush1.msra.mxu0 %v706
      %733 = vmatprep.subr.mxu0 0.0
      %734 = vmatpush1.msra.mxu0 %v707
      %735 = vmatprep.subr.mxu0 0.0
      %736 = vmatpush1.msra.mxu0 %v708
      %737 = vmatprep.subr.mxu0 0.0
      %738 = vmatpush1.msra.mxu0 %v709
      %739 = vmatprep.subr.mxu0 0.0
      %740 = vmatpush1.msra.mxu0 %v710
      %741 = vmatprep.subr.mxu0 0.0
      %742 = vmatpush1.msra.mxu0 %v711
      %743 = vmatprep.subr.mxu0 0.0
      %744 = vmatpush1.msra.mxu0 %v712
      %745 = vmatprep.subr.mxu0 0.0
      %746 = vmatpush1.msra.mxu0 0.0
      %747 = vmatprep.subr.mxu0 0.0
      %748 = vmatpush1.msra.mxu0 0.0
      %749 = vmatprep.subr.mxu0 0.0
      %750 = vmatpush1.msra.mxu0 0.0
      %751 = vmatprep.subr.mxu0 0.0
      %752 = vmatpush1.msra.mxu0 0.0
      %753 = vmatprep.subr.mxu0 0.0
      %754 = vmatpush1.msra.mxu0 0.0
      %755 = vmatprep.subr.mxu0 0.0
      %756 = vmatpush1.msra.mxu0 0.0
      %757 = vmatprep.subr.mxu0 0.0
      %758 = vmatpush1.msra.mxu0 0.0
      %759 = vmatprep.subr.mxu0 0.0
      %760 = vmatpush1.msra.mxu0 0.0
      %761 = vmatprep.subr.mxu0 0.0
      %762 = vmatpush1.msra.mxu0 0.0
      %763 = vmatprep.subr.mxu0 0.0
      %764 = vmatpush1.msra.mxu0 0.0
      %765 = vmatprep.subr.mxu0 0.0
      %766 = vmatpush1.msra.mxu0 0.0
      %767 = vmatprep.subr.mxu0 0.0
      %768 = vmatpush1.msra.mxu0 0.0
      %769 = vmatprep.subr.mxu0 0.0
      %770 = vmatpush1.msra.mxu0 0.0
      %771 = vmatprep.subr.mxu0 0.0
      %772 = vmatpush1.msra.mxu0 0.0
      %773 = vmatprep.subr.mxu0 0.0
      %774 = vmatpush1.msra.mxu0 0.0
      %775 = vmatprep.subr.mxu0 0.0
      %776 = vmatpush1.msra.mxu0 0.0
      %777 = vmatprep.mubr.f32.mxu0 0.0
      %778 = vmatmul.mubr.f32.gmra.mrb[0].mxu0 %v681
      %v779 = vpop.f32.mrb[0].mxu0
      %v780 = vadd.f32 %v235, %v779
      %v781 = vpop.f32.mrb[0].mxu0
      %782 = vmatprep.mubr.f32.mxu0 0.0
      %783 = vmatmul.mubr.f32.gmra.mrb[0].mxu0 %v682
      %v784 = vpop.f32.mrb[0].mxu0
      %v785 = vadd.f32 %v235, %v784
      %v786 = vpop.f32.mrb[0].mxu0
      %787 = vmatprep.mubr.f32.mxu0 0.0
      %788 = vmatmul.mubr.f32.gmra.mrb[0].mxu0 %v683
      %v789 = vpop.f32.mrb[0].mxu0
      %v790 = vadd.f32 %v235, %v789
      %v791 = vpop.f32.mrb[0].mxu0
      %792 = vmatprep.mubr.f32.mxu0 0.0
      %793 = vmatmul.mubr.f32.gmra.mrb[0].mxu0 %v684
      %v794 = vpop.f32.mrb[0].mxu0
      %v795 = vadd.f32 %v235, %v794
      %v796 = vpop.f32.mrb[0].mxu0
      %797 = vmatprep.mubr.f32.mxu0 0.0
      %798 = vmatmul.mubr.f32.gmra.mrb[0].mxu0 %v685
      %v799 = vpop.f32.mrb[0].mxu0
      %v800 = vadd.f32 %v235, %v799
      %v801 = vpop.f32.mrb[0].mxu0
      %802 = vmatprep.mubr.f32.mxu0 0.0
      %803 = vmatmul.mubr.f32.gmra.mrb[0].mxu0 %v686
      %v804 = vpop.f32.mrb[0].mxu0
      %v805 = vadd.f32 %v235, %v804
      %v806 = vpop.f32.mrb[0].mxu0
      %807 = vmatprep.mubr.f32.mxu0 0.0
      %808 = vmatmul.mubr.f32.gmra.mrb[0].mxu0 %v687
      %v809 = vpop.f32.mrb[0].mxu0
      %v810 = vadd.f32 %v235, %v809
      %v811 = vpop.f32.mrb[0].mxu0
      %812 = vmatprep.mubr.f32.mxu0 0.0
      %813 = vmatmul.mubr.f32.gmra.mrb[0].mxu0 %v688
      %v814 = vpop.f32.mrb[0].mxu0
      %v815 = vadd.f32 %v235, %v814
      %v816 = vpop.f32.mrb[0].mxu0
      %817 = vmatprep.mubr.f32.mxu0 0.0
      %818 = vmatmul.mubr.f32.gmra.mrb[0].mxu0 %v689
      %v819 = vpop.f32.mrb[0].mxu0
      %v820 = vadd.f32 %v235, %v819
      %v821 = vpop.f32.mrb[0].mxu0
      %822 = vmatprep.mubr.f32.mxu0 0.0
      %823 = vmatmul.mubr.f32.gmra.mrb[0].mxu0 %v690
      %v824 = vpop.f32.mrb[0].mxu0
      %v825 = vadd.f32 %v235, %v824
      %v826 = vpop.f32.mrb[0].mxu0
      %827 = vmatprep.mubr.f32.mxu0 0.0
      %828 = vmatmul.mubr.f32.gmra.mrb[0].mxu0 %v691
      %v829 = vpop.f32.mrb[0].mxu0
      %v830 = vadd.f32 %v235, %v829
      %v831 = vpop.f32.mrb[0].mxu0
      %832 = vmatprep.mubr.f32.mxu0 0.0
      %833 = vmatmul.mubr.f32.gmra.mrb[0].mxu0 %v692
      %v834 = vpop.f32.mrb[0].mxu0
      %v835 = vadd.f32 %v235, %v834
      %v836 = vpop.f32.mrb[0].mxu0
      %837 = vmatprep.mubr.f32.mxu0 0.0
      %838 = vmatmul.mubr.f32.gmra.mrb[0].mxu0 %v693
      %v839 = vpop.f32.mrb[0].mxu0
      %v840 = vadd.f32 %v235, %v839
      %v841 = vpop.f32.mrb[0].mxu0
      %842 = vmatprep.mubr.f32.mxu0 0.0
      %843 = vmatmul.mubr.f32.gmra.mrb[0].mxu0 %v694
      %v844 = vpop.f32.mrb[0].mxu0
      %v845 = vadd.f32 %v235, %v844
      %v846 = vpop.f32.mrb[0].mxu0
      %847 = vmatprep.mubr.f32.mxu0 0.0
      %848 = vmatmul.mubr.f32.gmra.mrb[0].mxu0 %v695
      %v849 = vpop.f32.mrb[0].mxu0
      %v850 = vadd.f32 %v235, %v849
      %v851 = vpop.f32.mrb[0].mxu0
      %852 = vmatprep.mubr.f32.mxu0 0.0
      %853 = vmatmul.mubr.f32.gmra.mrb[0].mxu0 %v696
      %v854 = vpop.f32.mrb[0].mxu0
      %v855 = vadd.f32 %v235, %v854
      %v856 = vpop.f32.mrb[0].mxu0
      %857 = vdwg.mxu0
      %v858 = vtanh.pop %v780
      %v859 = vtanh.pop %v785
      %v860 = vtanh.pop %v790
      %v861 = vtanh.pop %v795
      %v862 = vtanh.pop %v800
      %v863 = vtanh.pop %v805
      %v864 = vtanh.pop %v810
      %v865 = vtanh.pop %v815
      %v866 = vtanh.pop %v820
      %v867 = vtanh.pop %v825
      %v868 = vtanh.pop %v830
      %v869 = vtanh.pop %v835
      %v870 = vtanh.pop %v840
      %v871 = vtanh.pop %v845
      %v872 = vtanh.pop %v850
      %v873 = vtanh.pop %v855
      %v874 = vmul.f32 %v858, %v402
      %v875 = vmul.f32 %v859, %v402
      %v876 = vmul.f32 %v860, %v402
      %v877 = vmul.f32 %v861, %v402
      %v878 = vmul.f32 %v862, %v402
      %v879 = vmul.f32 %v863, %v402
      %v880 = vmul.f32 %v864, %v402
      %v881 = vmul.f32 %v865, %v402
      %v882 = vmul.f32 %v866, %v402
      %v883 = vmul.f32 %v867, %v402
      %v884 = vmul.f32 %v868, %v402
      %v885 = vmul.f32 %v869, %v402
      %v886 = vmul.f32 %v870, %v402
      %v887 = vmul.f32 %v871, %v402
      %v888 = vmul.f32 %v872, %v402
      %v889 = vmul.f32 %v873, %v402
      %v890 = vld [vmem:[#allocation2 + $0x2] sm:$0x1]
      %v891 = vadd.f32 %v874, %v875
      %v892 = vadd.f32 %v891, %v876
      %v893 = vadd.f32 %v892, %v877
      %v894 = vadd.f32 %v893, %v878
      %v895 = vadd.f32 %v894, %v879
      %v896 = vadd.f32 %v895, %v880
      %v897 = vadd.f32 %v896, %v881
      %v898 = vadd.f32 %v897, %v882
      %v899 = vadd.f32 %v898, %v883
      %v900 = vadd.f32 %v899, %v884
      %v901 = vadd.f32 %v900, %v885
      %v902 = vadd.f32 %v901, %v886
      %v903 = vadd.f32 %v902, %v887
      %v904 = vadd.f32 %v903, %v888
      %v905 = vadd.f32 %v904, %v889
      %v906 = vrot.slane %v905, 4
      %v907 = vadd.f32 %v905, %v906
      %v908 = vrot.slane %v907, 2
      %v909 = vadd.f32 %v907, %v908
      %v910 = vrot.slane %v909, 1
      %v911 = vadd.f32 %v909, %v910
      %v912 = vadd.f32 %v890, %v911
      %913 = vst.msk [vmem:[#allocation2 + $0x2] sm:$0x1] %vm446, %v912
      %v914 = vld [vmem:[%s186 + $0x18] sm:$0xff]
      %v915 = vld [vmem:[%s186 + $0x38] sm:$0xff]
      %v916 = vld [vmem:[%s186 + $0x58] sm:$0xff]
      %v917 = vld [vmem:[%s186 + $0x78] sm:$0xff]
      %v918 = vld [vmem:[%s186 + $0x98] sm:$0xff]
      %v919 = vld [vmem:[%s186 + $0xb8] sm:$0xff]
      %v920 = vld [vmem:[%s186 + $0xd8] sm:$0xff]
      %v921 = vld [vmem:[%s186 + $0xf8] sm:$0xff]
      %v922 = vld [vmem:[%s186 + $0x118] sm:$0xff]
      %v923 = vld [vmem:[%s186 + $0x138] sm:$0xff]
      %v924 = vld [vmem:[%s186 + $0x158] sm:$0xff]
      %v925 = vld [vmem:[%s186 + $0x178] sm:$0xff]
      %v926 = vld [vmem:[%s186 + $0x198] sm:$0xff]
      %v927 = vld [vmem:[%s186 + $0x1b8] sm:$0xff]
      %v928 = vld [vmem:[%s186 + $0x1d8] sm:$0xff]
      %v929 = vld [vmem:[%s186 + $0x1f8] sm:$0xff]
      %v930 = vld [vmem:[%s1] sm:$0xff]
      %v931 = vld [vmem:[%s1 + $0x8] sm:$0xff]
      %v932 = vld [vmem:[%s1 + $0x10] sm:$0xff]
      %v933 = vld [vmem:[%s1 + $0x18] sm:$0xff]
      %v934 = vld [vmem:[%s1 + $0x20] sm:$0xff]
      %v935 = vld [vmem:[%s1 + $0x28] sm:$0xff]
      %v936 = vld [vmem:[%s1 + $0x30] sm:$0xff]
      %v937 = vld [vmem:[%s1 + $0x38] sm:$0xff]
      %v938 = vld [vmem:[%s1 + $0x40] sm:$0xff]
      %v939 = vld [vmem:[%s1 + $0x48] sm:$0xff]
      %v940 = vld [vmem:[%s1 + $0x50] sm:$0xff]
      %v941 = vld [vmem:[%s1 + $0x58] sm:$0xff]
      %v942 = vld [vmem:[%s1 + $0x60] sm:$0xff]
      %v943 = vld [vmem:[%s1 + $0x68] sm:$0xff]
      %v944 = vld [vmem:[%s1 + $0x70] sm:$0xff]
      %v945 = vld [vmem:[%s1 + $0x78] sm:$0xff]
      %946 = vmatprep.subr.mxu0 0.0
      %947 = vmatpush1.msra.mxu0 %v930
      %948 = vmatprep.subr.mxu0 0.0
      %949 = vmatpush1.msra.mxu0 %v931
      %950 = vmatprep.subr.mxu0 0.0
      %951 = vmatpush1.msra.mxu0 %v932
      %952 = vmatprep.subr.mxu0 0.0
      %953 = vmatpush1.msra.mxu0 %v933
      %954 = vmatprep.subr.mxu0 0.0
      %955 = vmatpush1.msra.mxu0 %v934
      %956 = vmatprep.subr.mxu0 0.0
      %957 = vmatpush1.msra.mxu0 %v935
      %958 = vmatprep.subr.mxu0 0.0
      %959 = vmatpush1.msra.mxu0 %v936
      %960 = vmatprep.subr.mxu0 0.0
      %961 = vmatpush1.msra.mxu0 %v937
      %962 = vmatprep.subr.mxu0 0.0
      %963 = vmatpush1.msra.mxu0 %v938
      %964 = vmatprep.subr.mxu0 0.0
      %965 = vmatpush1.msra.mxu0 %v939
      %966 = vmatprep.subr.mxu0 0.0
      %967 = vmatpush1.msra.mxu0 %v940
      %968 = vmatprep.subr.mxu0 0.0
      %969 = vmatpush1.msra.mxu0 %v941
      %970 = vmatprep.subr.mxu0 0.0
      %971 = vmatpush1.msra.mxu0 %v942
      %972 = vmatprep.subr.mxu0 0.0
      %973 = vmatpush1.msra.mxu0 %v943
      %974 = vmatprep.subr.mxu0 0.0
      %975 = vmatpush1.msra.mxu0 %v944
      %976 = vmatprep.subr.mxu0 0.0
      %977 = vmatpush1.msra.mxu0 %v945
      %978 = vmatprep.subr.mxu0 0.0
      %979 = vmatpush1.msra.mxu0 0.0
      %980 = vmatprep.subr.mxu0 0.0
      %981 = vmatpush1.msra.mxu0 0.0
      %982 = vmatprep.subr.mxu0 0.0
      %983 = vmatpush1.msra.mxu0 0.0
      %984 = vmatprep.subr.mxu0 0.0
      %985 = vmatpush1.msra.mxu0 0.0
      %986 = vmatprep.subr.mxu0 0.0
      %987 = vmatpush1.msra.mxu0 0.0
      %988 = vmatprep.subr.mxu0 0.0
      %989 = vmatpush1.msra.mxu0 0.0
      %990 = vmatprep.subr.mxu0 0.0
      %991 = vmatpush1.msra.mxu0 0.0
      %992 = vmatprep.subr.mxu0 0.0
      %993 = vmatpush1.msra.mxu0 0.0
      %994 = vmatprep.subr.mxu0 0.0
      %995 = vmatpush1.msra.mxu0 0.0
      %996 = vmatprep.subr.mxu0 0.0
      %997 = vmatpush1.msra.mxu0 0.0
      %998 = vmatprep.subr.mxu0 0.0
      %999 = vmatpush1.msra.mxu0 0.0
      %1000 = vmatprep.subr.mxu0 0.0
      %1001 = vmatpush1.msra.mxu0 0.0
      %1002 = vmatprep.subr.mxu0 0.0
      %1003 = vmatpush1.msra.mxu0 0.0
      %1004 = vmatprep.subr.mxu0 0.0
      %1005 = vmatpush1.msra.mxu0 0.0
      %1006 = vmatprep.subr.mxu0 0.0
      %1007 = vmatpush1.msra.mxu0 0.0
      %1008 = vmatprep.subr.mxu0 0.0
      %1009 = vmatpush1.msra.mxu0 0.0
      %1010 = vmatprep.mubr.f32.mxu0 0.0
      %1011 = vmatmul.mubr.f32.gmra.mrb[0].mxu0 %v914
      %v1012 = vpop.f32.mrb[0].mxu0
      %v1013 = vadd.f32 %v235, %v1012
      %v1014 = vpop.f32.mrb[0].mxu0
      %1015 = vmatprep.mubr.f32.mxu0 0.0
      %1016 = vmatmul.mubr.f32.gmra.mrb[0].mxu0 %v915
      %v1017 = vpop.f32.mrb[0].mxu0
      %v1018 = vadd.f32 %v235, %v1017
      %v1019 = vpop.f32.mrb[0].mxu0
      %1020 = vmatprep.mubr.f32.mxu0 0.0
      %1021 = vmatmul.mubr.f32.gmra.mrb[0].mxu0 %v916
      %v1022 = vpop.f32.mrb[0].mxu0
      %v1023 = vadd.f32 %v235, %v1022
      %v1024 = vpop.f32.mrb[0].mxu0
      %1025 = vmatprep.mubr.f32.mxu0 0.0
      %1026 = vmatmul.mubr.f32.gmra.mrb[0].mxu0 %v917
      %v1027 = vpop.f32.mrb[0].mxu0
      %v1028 = vadd.f32 %v235, %v1027
      %v1029 = vpop.f32.mrb[0].mxu0
      %1030 = vmatprep.mubr.f32.mxu0 0.0
      %1031 = vmatmul.mubr.f32.gmra.mrb[0].mxu0 %v918
      %v1032 = vpop.f32.mrb[0].mxu0
      %v1033 = vadd.f32 %v235, %v1032
      %v1034 = vpop.f32.mrb[0].mxu0
      %1035 = vmatprep.mubr.f32.mxu0 0.0
      %1036 = vmatmul.mubr.f32.gmra.mrb[0].mxu0 %v919
      %v1037 = vpop.f32.mrb[0].mxu0
      %v1038 = vadd.f32 %v235, %v1037
      %v1039 = vpop.f32.mrb[0].mxu0
      %1040 = vmatprep.mubr.f32.mxu0 0.0
      %1041 = vmatmul.mubr.f32.gmra.mrb[0].mxu0 %v920
      %v1042 = vpop.f32.mrb[0].mxu0
      %v1043 = vadd.f32 %v235, %v1042
      %v1044 = vpop.f32.mrb[0].mxu0
      %1045 = vmatprep.mubr.f32.mxu0 0.0
      %1046 = vmatmul.mubr.f32.gmra.mrb[0].mxu0 %v921
      %v1047 = vpop.f32.mrb[0].mxu0
      %v1048 = vadd.f32 %v235, %v1047
      %v1049 = vpop.f32.mrb[0].mxu0
      %1050 = vmatprep.mubr.f32.mxu0 0.0
      %1051 = vmatmul.mubr.f32.gmra.mrb[0].mxu0 %v922
      %v1052 = vpop.f32.mrb[0].mxu0
      %v1053 = vadd.f32 %v235, %v1052
      %v1054 = vpop.f32.mrb[0].mxu0
      %1055 = vmatprep.mubr.f32.mxu0 0.0
      %1056 = vmatmul.mubr.f32.gmra.mrb[0].mxu0 %v923
      %v1057 = vpop.f32.mrb[0].mxu0
      %v1058 = vadd.f32 %v235, %v1057
      %v1059 = vpop.f32.mrb[0].mxu0
      %1060 = vmatprep.mubr.f32.mxu0 0.0
      %1061 = vmatmul.mubr.f32.gmra.mrb[0].mxu0 %v924
      %v1062 = vpop.f32.mrb[0].mxu0
      %v1063 = vadd.f32 %v235, %v1062
      %v1064 = vpop.f32.mrb[0].mxu0
      %1065 = vmatprep.mubr.f32.mxu0 0.0
      %1066 = vmatmul.mubr.f32.gmra.mrb[0].mxu0 %v925
      %v1067 = vpop.f32.mrb[0].mxu0
      %v1068 = vadd.f32 %v235, %v1067
      %v1069 = vpop.f32.mrb[0].mxu0
      %1070 = vmatprep.mubr.f32.mxu0 0.0
      %1071 = vmatmul.mubr.f32.gmra.mrb[0].mxu0 %v926
      %v1072 = vpop.f32.mrb[0].mxu0
      %v1073 = vadd.f32 %v235, %v1072
      %v1074 = vpop.f32.mrb[0].mxu0
      %1075 = vmatprep.mubr.f32.mxu0 0.0
      %1076 = vmatmul.mubr.f32.gmra.mrb[0].mxu0 %v927
      %v1077 = vpop.f32.mrb[0].mxu0
      %v1078 = vadd.f32 %v235, %v1077
      %v1079 = vpop.f32.mrb[0].mxu0
      %1080 = vmatprep.mubr.f32.mxu0 0.0
      %1081 = vmatmul.mubr.f32.gmra.mrb[0].mxu0 %v928
      %v1082 = vpop.f32.mrb[0].mxu0
      %v1083 = vadd.f32 %v235, %v1082
      %v1084 = vpop.f32.mrb[0].mxu0
      %1085 = vmatprep.mubr.f32.mxu0 0.0
      %1086 = vmatmul.mubr.f32.gmra.mrb[0].mxu0 %v929
      %v1087 = vpop.f32.mrb[0].mxu0
      %v1088 = vadd.f32 %v235, %v1087
      %v1089 = vpop.f32.mrb[0].mxu0
      %1090 = vdwg.mxu0
      %v1091 = vtanh.pop %v1013
      %v1092 = vtanh.pop %v1018
      %v1093 = vtanh.pop %v1023
      %v1094 = vtanh.pop %v1028
      %v1095 = vtanh.pop %v1033
      %v1096 = vtanh.pop %v1038
      %v1097 = vtanh.pop %v1043
      %v1098 = vtanh.pop %v1048
      %v1099 = vtanh.pop %v1053
      %v1100 = vtanh.pop %v1058
      %v1101 = vtanh.pop %v1063
      %v1102 = vtanh.pop %v1068
      %v1103 = vtanh.pop %v1073
      %v1104 = vtanh.pop %v1078
      %v1105 = vtanh.pop %v1083
      %v1106 = vtanh.pop %v1088
      %v1107 = vmul.f32 %v1091, %v402
      %v1108 = vmul.f32 %v1092, %v402
      %v1109 = vmul.f32 %v1093, %v402
      %v1110 = vmul.f32 %v1094, %v402
      %v1111 = vmul.f32 %v1095, %v402
      %v1112 = vmul.f32 %v1096, %v402
      %v1113 = vmul.f32 %v1097, %v402
      %v1114 = vmul.f32 %v1098, %v402
      %v1115 = vmul.f32 %v1099, %v402
      %v1116 = vmul.f32 %v1100, %v402
      %v1117 = vmul.f32 %v1101, %v402
      %v1118 = vmul.f32 %v1102, %v402
      %v1119 = vmul.f32 %v1103, %v402
      %v1120 = vmul.f32 %v1104, %v402
      %v1121 = vmul.f32 %v1105, %v402
      %v1122 = vmul.f32 %v1106, %v402
      %v1123 = vld [vmem:[#allocation2 + $0x3] sm:$0x1]
      %v1124 = vadd.f32 %v1107, %v1108
      %v1125 = vadd.f32 %v1124, %v1109
      %v1126 = vadd.f32 %v1125, %v1110
      %v1127 = vadd.f32 %v1126, %v1111
      %v1128 = vadd.f32 %v1127, %v1112
      %v1129 = vadd.f32 %v1128, %v1113
      %v1130 = vadd.f32 %v1129, %v1114
      %v1131 = vadd.f32 %v1130, %v1115
      %v1132 = vadd.f32 %v1131, %v1116
      %v1133 = vadd.f32 %v1132, %v1117
      %v1134 = vadd.f32 %v1133, %v1118
      %v1135 = vadd.f32 %v1134, %v1119
      %v1136 = vadd.f32 %v1135, %v1120
      %v1137 = vadd.f32 %v1136, %v1121
      %v1138 = vadd.f32 %v1137, %v1122
      %v1139 = vrot.slane %v1138, 4
      %v1140 = vadd.f32 %v1138, %v1139
      %v1141 = vrot.slane %v1140, 2
      %v1142 = vadd.f32 %v1140, %v1141
      %v1143 = vrot.slane %v1142, 1
      %v1144 = vadd.f32 %v1142, %v1143
      %v1145 = vadd.f32 %v1123, %v1144
      %1146 = vst.msk [vmem:[#allocation2 + $0x3] sm:$0x1] %vm446, %v1145
      %p1147 = scmp.eq.s32.totalorder %s15, 3
      // Predicated region
      $region41: #{semantic_attention.2} parent=35 // pred_check
        %p1148 = pneg %p1147
      $region42: #{semantic_attention.2} parent=35 // pred_check_branch
        %1150 = sbr.rel (%p1148) target = $region44
      $region43: #{semantic_attention.2} parent=35 // pred_region
        %v1151 = vld [vmem:[#allocation2] sm:$0x1]
        %vm1152 = vcmask 1040384
        %v1153 = vsel %vm1152, %v1151, 0.0
        %1154 = vadd.xlane.f32.xlu0 %v1153
        %v1155 = vpop.xlane.xlu0 %1154
        %v1156 = vmul.f32 %v1155, 0.001953125
        %v1157 = vld [vmem:[#allocation2 + $0x1] sm:$0x1]
        %v1158 = vsel %vm1152, %v1157, 0.0
        %1159 = vadd.xlane.f32.xlu0 %v1158
        %v1160 = vpop.xlane.xlu0 %1159
        %v1161 = vmul.f32 %v1160, 0.001953125
        %v1162 = vld [vmem:[#allocation2 + $0x2] sm:$0x1]
        %v1163 = vsel %vm1152, %v1162, 0.0
        %1164 = vadd.xlane.f32.xlu0 %v1163
        %v1165 = vpop.xlane.xlu0 %1164
        %v1166 = vmul.f32 %v1165, 0.001953125
        %v1167 = vld [vmem:[#allocation2 + $0x3] sm:$0x1]
        %v1168 = vsel %vm1152, %v1167, 0.0
        %1169 = vadd.xlane.f32.xlu0 %v1168
        %v1170 = vpop.xlane.xlu0 %1169
        %v1171 = vmul.f32 %v1170, 0.001953125
        %v1172 = vmax.f32 %v1156, %v1161
        %v1173 = vmax.f32 %v1172, %v1166
        %v1174 = vmax.f32 %v1173, %v1171
        %v1175 = vsub.f32 %v1156, %v1174
        %v1176 = vmul.f32 %v1175, 1.442695
        %v1177 = vpow.pop %v1176
        %v1178 = vsub.f32 %v1161, %v1174
        %v1179 = vmul.f32 %v1178, 1.442695
        %v1180 = vpow.pop %v1179
        %v1181 = vsub.f32 %v1166, %v1174
        %v1182 = vmul.f32 %v1181, 1.442695
        %v1183 = vpow.pop %v1182
        %v1184 = vsub.f32 %v1171, %v1174
        %v1185 = vmul.f32 %v1184, 1.442695
        %v1186 = vpow.pop %v1185
        %v1187 = vadd.f32 %v1177, %v1180
        %v1188 = vadd.f32 %v1187, %v1183
        %v1189 = vadd.f32 %v1188, %v1186
        %v1190 = vrcp.pop %v1189
        %v1191 = vmul.f32 1.0, %v1190
        %v1192 = vmul.f32 %v1177, %v1191
        %1193 = vst.msk [vmem:[%s4] sm:$0x1] %vm446, %v1192
        %v1194 = vmul.f32 %v1180, %v1191
        %1195 = vst.msk [vmem:[%s4 + $0x1] sm:$0x1] %vm446, %v1194
        %v1196 = vmul.f32 %v1183, %v1191
        %1197 = vst.msk [vmem:[%s4 + $0x2] sm:$0x1] %vm446, %v1196
        %v1198 = vmul.f32 %v1186, %v1191
        %1199 = vst.msk [vmem:[%s4 + $0x3] sm:$0x1] %vm446, %v1198
      $region44: #{semantic_attention.2} parent=35 // pred_fallthru
        _
      // Predicated region
      $region45: #{semantic_attention.2} parent=35 // pred_check
        %p1200 = pneg %p117
      $region46: #{semantic_attention.2} parent=35 // pred_check_branch
        %1202 = sbr.rel (%p1200) target = $region48
      $region47: #{semantic_attention.2} parent=35 // pred_region
        _
      $region48: #{semantic_attention.2} parent=35 // pred_fallthru
        _
      // Predicated region
      $region49: #{semantic_attention.2} parent=35 // pred_check
        %p1203 = pneg %p117
      $region50: #{semantic_attention.2} parent=35 // pred_check_branch
        %1205 = sbr.rel (%p1203) target = $region52
      $region51: #{semantic_attention.2} parent=35 // pred_region
        _
      $region52: #{semantic_attention.2} parent=35 // pred_fallthru
        _
    $region36: #{semantic_attention.2} parent=5 // pred_fallthru
      _
    %p1206 = scmp.le.s32.totalorder 2, %s10
    // Predicated region
    $region53: #{semantic_attention.2} parent=5 // pred_check
      %p1207 = pneg %p1206
    $region54: #{semantic_attention.2} parent=5 // pred_check_branch
      %1209 = sbr.rel (%p1207) target = $region56
    $region55: #{semantic_attention.2} parent=5 // pred_region
      %s1210 = ssub.s32 %s10, 2
    $region56: #{semantic_attention.2} parent=5 // pred_fallthru
      _
  $region6: #{semantic_attention.2} parent=0 // loop_footer
    %s14 = sadd.s32 1, %s10
  $region7: #{semantic_attention.2} parent=0 // loop_footer_branch
    %9 = sbr.rel target = $region3
  $region8: #{semantic_attention.2} parent=0 // loop_exit
    _

</llo_original>
